<compile_context>
chip_gen: v7x
topology: tpu7x:2x2x1
jax: 0.10.0
libtpu: 0.0.40
codegen_flags: <defaults>
</compile_context>

<pallas_src>
import functools

import jax
import jax.numpy as jnp
import numpy as np
from jax.experimental import pallas as pl
from jax.experimental.pallas import tpu as pltpu

KSIZE = 7
PAD = 3  # padding = 3 for kernel_size = 7


def _spatial_attention_kernel(w_ref, m_ref, x_ref, o_ref,
                              sum_ref, max_ref, vbuf_ref, hbuf_ref, *, C, W):
    # w_ref:    (2*K*K,)          flattened conv weights in SMEM (scalar reads)
    # m_ref:    (K, L)            per-dx column-validity masks (0/1 f32), VMEM
    # x_ref:    (C_TILE, L)       one channel tile of one batch element, L = H*W
    # o_ref:    (1, L)            output attention map (flat spatial)
    # sum_ref:  (1, L)            running channel sum (VMEM scratch)
    # max_ref:  (1, L)            running channel max (VMEM scratch)
    # vbuf_ref: (2, L + 2*PAD*W)  vertically zero-padded [avg, max] (flat layout)
    # hbuf_ref: (1, L + 2*PAD)    horizontally zero-padded row-conv partials
    ct = pl.program_id(1)
    CT, L = x_ref.shape

    # ---- channel reduction for this C-tile (lane-dense (CT, L) layout) ----
    xb = x_ref[...].astype(jnp.float32)

    if CT >= 8:
        # Channel sum on the MXU: ones @ x; row 0 of the (8, L) result is the sum.
        ones = jnp.ones((8, CT), jnp.float32)
        tile_sum = jnp.dot(ones, xb, preferred_element_type=jnp.float32)[0:1, :]
    else:
        # Tiny channel tiles: a plain vector reduction is cheaper than the MXU.
        tile_sum = jnp.sum(xb, axis=0, keepdims=True)
    tile_max = jnp.max(xb, axis=0, keepdims=True)

    @pl.when(ct == 0)
    def _():
        sum_ref[...] = jnp.zeros(sum_ref.shape, sum_ref.dtype)
        max_ref[...] = jnp.full(max_ref.shape, -jnp.inf, max_ref.dtype)

    sum_ref[...] = sum_ref[...] + tile_sum
    max_ref[...] = jnp.maximum(max_ref[...], tile_max)

    # ---- epilogue on the last channel tile: 7x7 conv (2->1) + sigmoid ----
    @pl.when(ct == pl.num_programs(1) - 1)
    def _():
        avg = sum_ref[...] * (1.0 / C)   # (1, L)
        mx = max_ref[...]                # (1, L)

        # Zero only the padded borders (the interiors are overwritten below).
        # Done per output map (not once globally) because scratch is per-core
        # and the "parallel" batch axis may be sharded across TensorCores.
        zv = jnp.zeros((2, PAD * W), jnp.float32)
        vbuf_ref[:, 0:PAD * W] = zv
        vbuf_ref[:, PAD * W + L:2 * PAD * W + L] = zv
        zh = jnp.zeros((1, PAD), jnp.float32)
        hbuf_ref[:, 0:PAD] = zh
        hbuf_ref[:, PAD + L:2 * PAD + L] = zh

        # "cat([avg, max])" written into the vertically padded flat buffer.
        vbuf_ref[0:1, PAD * W:PAD * W + L] = avg
        vbuf_ref[1:2, PAD * W:PAD * W + L] = mx

        # 14 hoisted vertical (dy) shifts: plain slices of the zero-padded
        # buffer; out-of-image rows land in the zeroed border (no masks).
        vshift = [[vbuf_ref[c:c + 1, dy * W:dy * W + L] for dy in range(KSIZE)]
                  for c in range(2)]

        acc = jnp.zeros((1, L), jnp.float32)
        for dx in range(KSIZE):
            colsum = jnp.zeros((1, L), jnp.float32)
            for c in range(2):
                for dy in range(KSIZE):
                    wv = w_ref[c * KSIZE * KSIZE + dy * KSIZE + dx]
                    colsum = colsum + wv * vshift[c][dy]
            # Horizontal (dx) shift via the 3-lane-padded buffer, then mask
            # lanes whose source column fell outside the row (row wrap / pad).
            hbuf_ref[0:1, PAD:PAD + L] = colsum
            acc = acc + hbuf_ref[0:1, dx:dx + L] * m_ref[dx:dx + 1, :]

        o_ref[...] = jax.nn.sigmoid(acc).astype(o_ref.dtype)


def spatial_attention(x, w):
    """x: (N, C, H, W). w: (1, 2, K, K) conv weight (OIHW, no bias)."""
    N, C, H, W = x.shape
    L = H * W
    C_TILE = 8 if C % 8 == 0 else C
    assert C % C_TILE == 0
    n_ct = C // C_TILE

    x_flat = x.reshape(N, C, L)                       # lane-dense spatial axis
    w_flat = w.reshape(-1).astype(jnp.float32)        # (2*K*K,)

    # Per-dx column-validity masks: 1.0 where the shifted source column is a
    # real in-row pixel, 0.0 where it is zero padding / a row wrap-around.
    col = jnp.arange(L, dtype=jnp.int32) % W
    masks = jnp.stack(
        [((col + (dx - PAD) >= 0) & (col + (dx - PAD) < W)).astype(jnp.float32)
         for dx in range(KSIZE)], axis=0)             # (K, L)

    kernel = functools.partial(_spatial_attention_kernel, C=C, W=W)

    out_flat = pl.pallas_call(
        kernel,
        out_shape=jax.ShapeDtypeStruct((N, 1, L), x.dtype),
        grid_spec=pltpu.PrefetchScalarGridSpec(
            num_scalar_prefetch=0,
            grid=(N, n_ct),
            in_specs=[
                pl.BlockSpec(memory_space=pltpu.MemorySpace.SMEM),    # weights
                pl.BlockSpec((KSIZE, L), lambda b, ct: (0, 0)),       # masks
                pl.BlockSpec((pl.Squeezed(), C_TILE, L),
                             lambda b, ct: (b, ct, 0)),               # x tile
            ],
            out_specs=pl.BlockSpec((pl.Squeezed(), 1, L),
                                   lambda b, ct: (b, 0, 0)),
            scratch_shapes=[
                pltpu.VMEM((1, L), jnp.float32),                 # running sum
                pltpu.VMEM((1, L), jnp.float32),                 # running max
                pltpu.VMEM((2, L + 2 * PAD * W), jnp.float32),   # v-padded avg|max
                pltpu.VMEM((1, L + 2 * PAD), jnp.float32),       # h-padded partials
            ],
        ),
        compiler_params=pltpu.CompilerParams(
            dimension_semantics=("parallel", "arbitrary"),
            vmem_limit_bytes=32 * 1024 * 1024,
        ),
    )(w_flat, masks, x_flat)

    return out_flat.reshape(N, 1, H, W)


def ref_spatial_attention(x, w):
    """Pure-JAX reference matching the PyTorch forward."""
    avg = jnp.mean(x, axis=1, keepdims=True)
    mx = jnp.max(x, axis=1, keepdims=True)
    cat = jnp.concatenate([avg, mx], axis=1)
    y = jax.lax.conv_general_dilated(
        cat, w, window_strides=(1, 1),
        padding=[(PAD, PAD), (PAD, PAD)],
        dimension_numbers=("NCHW", "OIHW", "NCHW"),
    )
    return jax.nn.sigmoid(y)


if __name__ == "__main__":
    key = jax.random.PRNGKey(0)
    kx, kw = jax.random.split(key)

    # C=16 exercises the C-tiled accumulation (two 8-channel tiles) and the
    # MXU channel-sum path; H*W = 256 keeps the spatial/lane axis dense.
    N, C, H, W = 2, 16, 16, 16
    x = jax.random.normal(kx, (N, C, H, W), dtype=jnp.float32)

    # Deterministic conv weight init (PyTorch default: U(-1/sqrt(fan_in), +1/sqrt(fan_in)))
    fan_in = 2 * KSIZE * KSIZE
    bound = 1.0 / float(np.sqrt(fan_in))
    w = jax.random.uniform(kw, (1, 2, KSIZE, KSIZE), jnp.float32, -bound, bound)

    out = spatial_attention(x, w)
    out = jax.block_until_ready(out)

    ref = ref_spatial_attention(x, w)
    assert out.shape == (N, 1, H, W)
    np.testing.assert_allclose(np.asarray(out), np.asarray(ref), atol=1e-5, rtol=1e-5)

    print("KERNEL_OK")
</pallas_src>

<mosaic_0001>
module attributes {stable_mosaic.version = 11 : i64} {
  func.func @_spatial_attention_kernel(%arg0: i32, %arg1: i32, %arg2: memref<98xf32, #tpu.memory_space<smem>>, %arg3: memref<7x256xf32, #tpu.memory_space<vmem>>, %arg4: memref<1x8x256xf32, #tpu.memory_space<vmem>>, %arg5: memref<1x1x256xf32, #tpu.memory_space<vmem>>, %arg6: memref<1x256xf32, #tpu.memory_space<vmem>>, %arg7: memref<1x256xf32, #tpu.memory_space<vmem>>, %arg8: memref<2x352xf32, #tpu.memory_space<vmem>>, %arg9: memref<1x262xf32, #tpu.memory_space<vmem>>) attributes {dimension_semantics = [#tpu.dimension_semantics<parallel>, #tpu.dimension_semantics<arbitrary>], iteration_bounds = array<i64: 2, 2>, scalar_prefetch = 0 : i64, scratch_operands = 4 : i64, tpu.core_type = #tpu.core_type<tc>, window_params = [{transform_indices = @transform_0, window_bounds = array<i64: 98>}, {pipeline_mode = #tpu.pipeline_mode<synchronous>, transform_indices = @transform_1, window_bounds = array<i64: 7, 256>}, {transform_indices = @transform_2, window_bounds = array<i64: 1, 8, 256>}, {transform_indices = @transform_3, window_bounds = array<i64: 1, 1, 256>}]} {
    %c0 = arith.constant 0 : index
    %c0_0 = arith.constant 0 : index
    %c0_1 = arith.constant 0 : index
    %0 = vector.load %arg4[%c0, %c0_0, %c0_1] : memref<1x8x256xf32, #tpu.memory_space<vmem>>, vector<1x8x256xf32>
    %1 = vector.shape_cast %0 : vector<1x8x256xf32> to vector<8x256xf32>
    %cst = arith.constant 1.000000e+00 : f32
    %2 = vector.broadcast %cst : f32 to vector<8x8xf32>
    %cst_2 = arith.constant dense<0.000000e+00> : vector<8x256xf32>
    %3 = tpu.matmul %2, %1, %cst_2 {dimension_numbers = #tpu.dot_dimension_numbers<[1], [0], [0], [1], [0, 0, 1, 1], [], []>} : vector<8x8xf32>, vector<8x256xf32>, vector<8x256xf32> -> vector<8x256xf32>
    %4 = vector.extract_strided_slice %3 {offsets = [0, 0], sizes = [1, 256], strides = [1, 1]} : vector<8x256xf32> to vector<1x256xf32>
    %cst_3 = arith.constant dense<0xFF800000> : vector<256xf32>
    %5 = vector.multi_reduction <maximumf>, %1, %cst_3 [0] : vector<8x256xf32> to vector<256xf32>
    %6 = vector.shape_cast %5 : vector<256xf32> to vector<1x256xf32>
    %c0_i32 = arith.constant 0 : i32
    %7 = arith.cmpi eq, %arg1, %c0_i32 : i32
    %8 = arith.extui %7 : i1 to i32
    %c0_i32_4 = arith.constant 0 : i32
    %9 = arith.cmpi ne, %8, %c0_i32_4 : i32
    scf.if %9 {
      %cst_14 = arith.constant 0.000000e+00 : f32
      %19 = vector.broadcast %cst_14 : f32 to vector<1x256xf32>
      %c0_15 = arith.constant 0 : index
      %c0_16 = arith.constant 0 : index
      %20 = vector.load %arg6[%c0_15, %c0_16] : memref<1x256xf32, #tpu.memory_space<vmem>>, vector<1x256xf32>
      tpu.vector_store %arg6[%c0_15, %c0_16], %19 {strides = array<i32>} : memref<1x256xf32, #tpu.memory_space<vmem>>, vector<1x256xf32>,
      %cst_17 = arith.constant 0xFF800000 : f32
      %21 = vector.broadcast %cst_17 : f32 to vector<1x256xf32>
      %c0_18 = arith.constant 0 : index
      %c0_19 = arith.constant 0 : index
      %22 = vector.load %arg7[%c0_18, %c0_19] : memref<1x256xf32, #tpu.memory_space<vmem>>, vector<1x256xf32>
      tpu.vector_store %arg7[%c0_18, %c0_19], %21 {strides = array<i32>} : memref<1x256xf32, #tpu.memory_space<vmem>>, vector<1x256xf32>,
    } else {
    }
    %c0_5 = arith.constant 0 : index
    %c0_6 = arith.constant 0 : index
    %10 = vector.load %arg6[%c0_5, %c0_6] : memref<1x256xf32, #tpu.memory_space<vmem>>, vector<1x256xf32>
    %11 = arith.addf %10, %4 : vector<1x256xf32>
    %c0_7 = arith.constant 0 : index
    %c0_8 = arith.constant 0 : index
    %12 = vector.load %arg6[%c0_7, %c0_8] : memref<1x256xf32, #tpu.memory_space<vmem>>, vector<1x256xf32>
    tpu.vector_store %arg6[%c0_7, %c0_8], %11 {strides = array<i32>} : memref<1x256xf32, #tpu.memory_space<vmem>>, vector<1x256xf32>,
    %c0_9 = arith.constant 0 : index
    %c0_10 = arith.constant 0 : index
    %13 = vector.load %arg7[%c0_9, %c0_10] : memref<1x256xf32, #tpu.memory_space<vmem>>, vector<1x256xf32>
    %14 = arith.maximumf %13, %6 : vector<1x256xf32>
    %c0_11 = arith.constant 0 : index
    %c0_12 = arith.constant 0 : index
    %15 = vector.load %arg7[%c0_11, %c0_12] : memref<1x256xf32, #tpu.memory_space<vmem>>, vector<1x256xf32>
    tpu.vector_store %arg7[%c0_11, %c0_12], %14 {strides = array<i32>} : memref<1x256xf32, #tpu.memory_space<vmem>>, vector<1x256xf32>,
    %c1_i32 = arith.constant 1 : i32
    %16 = arith.cmpi eq, %arg1, %c1_i32 : i32
    %17 = arith.extui %16 : i1 to i32
    %c0_i32_13 = arith.constant 0 : i32
    %18 = arith.cmpi ne, %17, %c0_i32_13 : i32
    scf.if %18 {
      %c0_14 = arith.constant 0 : index
      %c0_15 = arith.constant 0 : index
      %19 = vector.load %arg6[%c0_14, %c0_15] : memref<1x256xf32, #tpu.memory_space<vmem>>, vector<1x256xf32>
      %cst_16 = arith.constant 6.250000e-02 : f32
      %20 = vector.broadcast %cst_16 : f32 to vector<1x256xf32>
      %21 = arith.mulf %19, %20 : vector<1x256xf32>
      %c0_17 = arith.constant 0 : index
      %c0_18 = arith.constant 0 : index
      %22 = vector.load %arg7[%c0_17, %c0_18] : memref<1x256xf32, #tpu.memory_space<vmem>>, vector<1x256xf32>
      %cst_19 = arith.constant 0.000000e+00 : f32
      %23 = vector.broadcast %cst_19 : f32 to vector<2x48xf32>
      %c0_20 = arith.constant 0 : index
      %c0_21 = arith.constant 0 : index
      %24 = vector.load %arg8[%c0_20, %c0_21] : memref<2x352xf32, #tpu.memory_space<vmem>>, vector<2x48xf32>
      tpu.vector_store %arg8[%c0_20, %c0_21], %23 {strides = array<i32>} : memref<2x352xf32, #tpu.memory_space<vmem>>, vector<2x48xf32>,
      %c0_22 = arith.constant 0 : index
      %c304 = arith.constant 304 : index
      %25 = vector.load %arg8[%c0_22, %c304] : memref<2x352xf32, #tpu.memory_space<vmem>>, vector<2x48xf32>
      tpu.vector_store %arg8[%c0_22, %c304], %23 {strides = array<i32>} : memref<2x352xf32, #tpu.memory_space<vmem>>, vector<2x48xf32>,
      %cst_23 = arith.constant 0.000000e+00 : f32
      %26 = vector.broadcast %cst_23 : f32 to vector<1x3xf32>
      %c0_24 = arith.constant 0 : index
      %c0_25 = arith.constant 0 : index
      %27 = vector.load %arg9[%c0_24, %c0_25] : memref<1x262xf32, #tpu.memory_space<vmem>>, vector<1x3xf32>
      tpu.vector_store %arg9[%c0_24, %c0_25], %26 {strides = array<i32>} : memref<1x262xf32, #tpu.memory_space<vmem>>, vector<1x3xf32>,
      %c0_26 = arith.constant 0 : index
      %c259 = arith.constant 259 : index
      %28 = vector.load %arg9[%c0_26, %c259] : memref<1x262xf32, #tpu.memory_space<vmem>>, vector<1x3xf32>
      tpu.vector_store %arg9[%c0_26, %c259], %26 {strides = array<i32>} : memref<1x262xf32, #tpu.memory_space<vmem>>, vector<1x3xf32>,
      %c0_27 = arith.constant 0 : index
      %c48 = arith.constant 48 : index
      %29 = vector.load %arg8[%c0_27, %c48] : memref<2x352xf32, #tpu.memory_space<vmem>>, vector<1x256xf32>
      tpu.vector_store %arg8[%c0_27, %c48], %21 {strides = array<i32>} : memref<2x352xf32, #tpu.memory_space<vmem>>, vector<1x256xf32>,
      %c1 = arith.constant 1 : index
      %c48_28 = arith.constant 48 : index
      %30 = vector.load %arg8[%c1, %c48_28] : memref<2x352xf32, #tpu.memory_space<vmem>>, vector<1x256xf32>
      tpu.vector_store %arg8[%c1, %c48_28], %22 {strides = array<i32>} : memref<2x352xf32, #tpu.memory_space<vmem>>, vector<1x256xf32>,
      %c0_29 = arith.constant 0 : index
      %c0_30 = arith.constant 0 : index
      %31 = vector.load %arg8[%c0_29, %c0_30] : memref<2x352xf32, #tpu.memory_space<vmem>>, vector<1x256xf32>
      %c0_31 = arith.constant 0 : index
      %c16 = arith.constant 16 : index
      %32 = vector.load %arg8[%c0_31, %c16] : memref<2x352xf32, #tpu.memory_space<vmem>>, vector<1x256xf32>
      %c0_32 = arith.constant 0 : index
      %c32 = arith.constant 32 : index
      %33 = vector.load %arg8[%c0_32, %c32] : memref<2x352xf32, #tpu.memory_space<vmem>>, vector<1x256xf32>
      %c0_33 = arith.constant 0 : index
      %c48_34 = arith.constant 48 : index
      %34 = vector.load %arg8[%c0_33, %c48_34] : memref<2x352xf32, #tpu.memory_space<vmem>>, vector<1x256xf32>
      %c0_35 = arith.constant 0 : index
      %c64 = arith.constant 64 : index
      %35 = vector.load %arg8[%c0_35, %c64] : memref<2x352xf32, #tpu.memory_space<vmem>>, vector<1x256xf32>
      %c0_36 = arith.constant 0 : index
      %c80 = arith.constant 80 : index
      %36 = vector.load %arg8[%c0_36, %c80] : memref<2x352xf32, #tpu.memory_space<vmem>>, vector<1x256xf32>
      %c0_37 = arith.constant 0 : index
      %c96 = arith.constant 96 : index
      %37 = vector.load %arg8[%c0_37, %c96] : memref<2x352xf32, #tpu.memory_space<vmem>>, vector<1x256xf32>
      %c1_38 = arith.constant 1 : index
      %c0_39 = arith.constant 0 : index
      %38 = vector.load %arg8[%c1_38, %c0_39] : memref<2x352xf32, #tpu.memory_space<vmem>>, vector<1x256xf32>
      %c1_40 = arith.constant 1 : index
      %c16_41 = arith.constant 16 : index
      %39 = vector.load %arg8[%c1_40, %c16_41] : memref<2x352xf32, #tpu.memory_space<vmem>>, vector<1x256xf32>
      %c1_42 = arith.constant 1 : index
      %c32_43 = arith.constant 32 : index
      %40 = vector.load %arg8[%c1_42, %c32_43] : memref<2x352xf32, #tpu.memory_space<vmem>>, vector<1x256xf32>
      %c1_44 = arith.constant 1 : index
      %c48_45 = arith.constant 48 : index
      %41 = vector.load %arg8[%c1_44, %c48_45] : memref<2x352xf32, #tpu.memory_space<vmem>>, vector<1x256xf32>
      %c1_46 = arith.constant 1 : index
      %c64_47 = arith.constant 64 : index
      %42 = vector.load %arg8[%c1_46, %c64_47] : memref<2x352xf32, #tpu.memory_space<vmem>>, vector<1x256xf32>
      %c1_48 = arith.constant 1 : index
      %c80_49 = arith.constant 80 : index
      %43 = vector.load %arg8[%c1_48, %c80_49] : memref<2x352xf32, #tpu.memory_space<vmem>>, vector<1x256xf32>
      %c1_50 = arith.constant 1 : index
      %c96_51 = arith.constant 96 : index
      %44 = vector.load %arg8[%c1_50, %c96_51] : memref<2x352xf32, #tpu.memory_space<vmem>>, vector<1x256xf32>
      %cst_52 = arith.constant 0.000000e+00 : f32
      %45 = vector.broadcast %cst_52 : f32 to vector<1x256xf32>
      %cst_53 = arith.constant 0.000000e+00 : f32
      %46 = vector.broadcast %cst_53 : f32 to vector<1x256xf32>
      %c0_54 = arith.constant 0 : index
      %47 = memref.load %arg2[%c0_54] : memref<98xf32, #tpu.memory_space<smem>>
      %48 = vector.broadcast %47 : f32 to vector<1x256xf32>
      %49 = arith.mulf %48, %31 : vector<1x256xf32>
      %50 = arith.addf %46, %49 : vector<1x256xf32>
      %c7 = arith.constant 7 : index
      %51 = memref.load %arg2[%c7] : memref<98xf32, #tpu.memory_space<smem>>
      %52 = vector.broadcast %51 : f32 to vector<1x256xf32>
      %53 = arith.mulf %52, %32 : vector<1x256xf32>
      %54 = arith.addf %50, %53 : vector<1x256xf32>
      %c14 = arith.constant 14 : index
      %55 = memref.load %arg2[%c14] : memref<98xf32, #tpu.memory_space<smem>>
      %56 = vector.broadcast %55 : f32 to vector<1x256xf32>
      %57 = arith.mulf %56, %33 : vector<1x256xf32>
      %58 = arith.addf %54, %57 : vector<1x256xf32>
      %c21 = arith.constant 21 : index
      %59 = memref.load %arg2[%c21] : memref<98xf32, #tpu.memory_space<smem>>
      %60 = vector.broadcast %59 : f32 to vector<1x256xf32>
      %61 = arith.mulf %60, %34 : vector<1x256xf32>
      %62 = arith.addf %58, %61 : vector<1x256xf32>
      %c28 = arith.constant 28 : index
      %63 = memref.load %arg2[%c28] : memref<98xf32, #tpu.memory_space<smem>>
      %64 = vector.broadcast %63 : f32 to vector<1x256xf32>
      %65 = arith.mulf %64, %35 : vector<1x256xf32>
      %66 = arith.addf %62, %65 : vector<1x256xf32>
      %c35 = arith.constant 35 : index
      %67 = memref.load %arg2[%c35] : memref<98xf32, #tpu.memory_space<smem>>
      %68 = vector.broadcast %67 : f32 to vector<1x256xf32>
      %69 = arith.mulf %68, %36 : vector<1x256xf32>
      %70 = arith.addf %66, %69 : vector<1x256xf32>
      %c42 = arith.constant 42 : index
      %71 = memref.load %arg2[%c42] : memref<98xf32, #tpu.memory_space<smem>>
      %72 = vector.broadcast %71 : f32 to vector<1x256xf32>
      %73 = arith.mulf %72, %37 : vector<1x256xf32>
      %74 = arith.addf %70, %73 : vector<1x256xf32>
      %c49 = arith.constant 49 : index
      %75 = memref.load %arg2[%c49] : memref<98xf32, #tpu.memory_space<smem>>
      %76 = vector.broadcast %75 : f32 to vector<1x256xf32>
      %77 = arith.mulf %76, %38 : vector<1x256xf32>
      %78 = arith.addf %74, %77 : vector<1x256xf32>
      %c56 = arith.constant 56 : index
      %79 = memref.load %arg2[%c56] : memref<98xf32, #tpu.memory_space<smem>>
      %80 = vector.broadcast %79 : f32 to vector<1x256xf32>
      %81 = arith.mulf %80, %39 : vector<1x256xf32>
      %82 = arith.addf %78, %81 : vector<1x256xf32>
      %c63 = arith.constant 63 : index
      %83 = memref.load %arg2[%c63] : memref<98xf32, #tpu.memory_space<smem>>
      %84 = vector.broadcast %83 : f32 to vector<1x256xf32>
      %85 = arith.mulf %84, %40 : vector<1x256xf32>
      %86 = arith.addf %82, %85 : vector<1x256xf32>
      %c70 = arith.constant 70 : index
      %87 = memref.load %arg2[%c70] : memref<98xf32, #tpu.memory_space<smem>>
      %88 = vector.broadcast %87 : f32 to vector<1x256xf32>
      %89 = arith.mulf %88, %41 : vector<1x256xf32>
      %90 = arith.addf %86, %89 : vector<1x256xf32>
      %c77 = arith.constant 77 : index
      %91 = memref.load %arg2[%c77] : memref<98xf32, #tpu.memory_space<smem>>
      %92 = vector.broadcast %91 : f32 to vector<1x256xf32>
      %93 = arith.mulf %92, %42 : vector<1x256xf32>
      %94 = arith.addf %90, %93 : vector<1x256xf32>
      %c84 = arith.constant 84 : index
      %95 = memref.load %arg2[%c84] : memref<98xf32, #tpu.memory_space<smem>>
      %96 = vector.broadcast %95 : f32 to vector<1x256xf32>
      %97 = arith.mulf %96, %43 : vector<1x256xf32>
      %98 = arith.addf %94, %97 : vector<1x256xf32>
      %c91 = arith.constant 91 : index
      %99 = memref.load %arg2[%c91] : memref<98xf32, #tpu.memory_space<smem>>
      %100 = vector.broadcast %99 : f32 to vector<1x256xf32>
      %101 = arith.mulf %100, %44 : vector<1x256xf32>
      %102 = arith.addf %98, %101 : vector<1x256xf32>
      %c0_55 = arith.constant 0 : index
      %c3 = arith.constant 3 : index
      %103 = vector.load %arg9[%c0_55, %c3] : memref<1x262xf32, #tpu.memory_space<vmem>>, vector<1x256xf32>
      tpu.vector_store %arg9[%c0_55, %c3], %102 {strides = array<i32>} : memref<1x262xf32, #tpu.memory_space<vmem>>, vector<1x256xf32>,
      %c0_56 = arith.constant 0 : index
      %c0_57 = arith.constant 0 : index
      %104 = vector.load %arg9[%c0_56, %c0_57] : memref<1x262xf32, #tpu.memory_space<vmem>>, vector<1x256xf32>
      %c0_58 = arith.constant 0 : index
      %c0_59 = arith.constant 0 : index
      %105 = vector.load %arg3[%c0_58, %c0_59] : memref<7x256xf32, #tpu.memory_space<vmem>>, vector<1x256xf32>
      %106 = arith.mulf %104, %105 : vector<1x256xf32>
      %107 = arith.addf %45, %106 : vector<1x256xf32>
      %cst_60 = arith.constant 0.000000e+00 : f32
      %108 = vector.broadcast %cst_60 : f32 to vector<1x256xf32>
      %c1_61 = arith.constant 1 : index
      %109 = memref.load %arg2[%c1_61] : memref<98xf32, #tpu.memory_space<smem>>
      %110 = vector.broadcast %109 : f32 to vector<1x256xf32>
      %111 = arith.mulf %110, %31 : vector<1x256xf32>
      %112 = arith.addf %108, %111 : vector<1x256xf32>
      %c8 = arith.constant 8 : index
      %113 = memref.load %arg2[%c8] : memref<98xf32, #tpu.memory_space<smem>>
      %114 = vector.broadcast %113 : f32 to vector<1x256xf32>
      %115 = arith.mulf %114, %32 : vector<1x256xf32>
      %116 = arith.addf %112, %115 : vector<1x256xf32>
      %c15 = arith.constant 15 : index
      %117 = memref.load %arg2[%c15] : memref<98xf32, #tpu.memory_space<smem>>
      %118 = vector.broadcast %117 : f32 to vector<1x256xf32>
      %119 = arith.mulf %118, %33 : vector<1x256xf32>
      %120 = arith.addf %116, %119 : vector<1x256xf32>
      %c22 = arith.constant 22 : index
      %121 = memref.load %arg2[%c22] : memref<98xf32, #tpu.memory_space<smem>>
      %122 = vector.broadcast %121 : f32 to vector<1x256xf32>
      %123 = arith.mulf %122, %34 : vector<1x256xf32>
      %124 = arith.addf %120, %123 : vector<1x256xf32>
      %c29 = arith.constant 29 : index
      %125 = memref.load %arg2[%c29] : memref<98xf32, #tpu.memory_space<smem>>
      %126 = vector.broadcast %125 : f32 to vector<1x256xf32>
      %127 = arith.mulf %126, %35 : vector<1x256xf32>
      %128 = arith.addf %124, %127 : vector<1x256xf32>
      %c36 = arith.constant 36 : index
      %129 = memref.load %arg2[%c36] : memref<98xf32, #tpu.memory_space<smem>>
      %130 = vector.broadcast %129 : f32 to vector<1x256xf32>
      %131 = arith.mulf %130, %36 : vector<1x256xf32>
      %132 = arith.addf %128, %131 : vector<1x256xf32>
      %c43 = arith.constant 43 : index
      %133 = memref.load %arg2[%c43] : memref<98xf32, #tpu.memory_space<smem>>
      %134 = vector.broadcast %133 : f32 to vector<1x256xf32>
      %135 = arith.mulf %134, %37 : vector<1x256xf32>
      %136 = arith.addf %132, %135 : vector<1x256xf32>
      %c50 = arith.constant 50 : index
      %137 = memref.load %arg2[%c50] : memref<98xf32, #tpu.memory_space<smem>>
      %138 = vector.broadcast %137 : f32 to vector<1x256xf32>
      %139 = arith.mulf %138, %38 : vector<1x256xf32>
      %140 = arith.addf %136, %139 : vector<1x256xf32>
      %c57 = arith.constant 57 : index
      %141 = memref.load %arg2[%c57] : memref<98xf32, #tpu.memory_space<smem>>
      %142 = vector.broadcast %141 : f32 to vector<1x256xf32>
      %143 = arith.mulf %142, %39 : vector<1x256xf32>
      %144 = arith.addf %140, %143 : vector<1x256xf32>
      %c64_62 = arith.constant 64 : index
      %145 = memref.load %arg2[%c64_62] : memref<98xf32, #tpu.memory_space<smem>>
      %146 = vector.broadcast %145 : f32 to vector<1x256xf32>
      %147 = arith.mulf %146, %40 : vector<1x256xf32>
      %148 = arith.addf %144, %147 : vector<1x256xf32>
      %c71 = arith.constant 71 : index
      %149 = memref.load %arg2[%c71] : memref<98xf32, #tpu.memory_space<smem>>
      %150 = vector.broadcast %149 : f32 to vector<1x256xf32>
      %151 = arith.mulf %150, %41 : vector<1x256xf32>
      %152 = arith.addf %148, %151 : vector<1x256xf32>
      %c78 = arith.constant 78 : index
      %153 = memref.load %arg2[%c78] : memref<98xf32, #tpu.memory_space<smem>>
      %154 = vector.broadcast %153 : f32 to vector<1x256xf32>
      %155 = arith.mulf %154, %42 : vector<1x256xf32>
      %156 = arith.addf %152, %155 : vector<1x256xf32>
      %c85 = arith.constant 85 : index
      %157 = memref.load %arg2[%c85] : memref<98xf32, #tpu.memory_space<smem>>
      %158 = vector.broadcast %157 : f32 to vector<1x256xf32>
      %159 = arith.mulf %158, %43 : vector<1x256xf32>
      %160 = arith.addf %156, %159 : vector<1x256xf32>
      %c92 = arith.constant 92 : index
      %161 = memref.load %arg2[%c92] : memref<98xf32, #tpu.memory_space<smem>>
      %162 = vector.broadcast %161 : f32 to vector<1x256xf32>
      %163 = arith.mulf %162, %44 : vector<1x256xf32>
      %164 = arith.addf %160, %163 : vector<1x256xf32>
      %c0_63 = arith.constant 0 : index
      %c3_64 = arith.constant 3 : index
      %165 = vector.load %arg9[%c0_63, %c3_64] : memref<1x262xf32, #tpu.memory_space<vmem>>, vector<1x256xf32>
      tpu.vector_store %arg9[%c0_63, %c3_64], %164 {strides = array<i32>} : memref<1x262xf32, #tpu.memory_space<vmem>>, vector<1x256xf32>,
      %c0_65 = arith.constant 0 : index
      %c1_66 = arith.constant 1 : index
      %166 = vector.load %arg9[%c0_65, %c1_66] : memref<1x262xf32, #tpu.memory_space<vmem>>, vector<1x256xf32>
      %c1_67 = arith.constant 1 : index
      %c0_68 = arith.constant 0 : index
      %167 = vector.load %arg3[%c1_67, %c0_68] : memref<7x256xf32, #tpu.memory_space<vmem>>, vector<1x256xf32>
      %168 = arith.mulf %166, %167 : vector<1x256xf32>
      %169 = arith.addf %107, %168 : vector<1x256xf32>
      %cst_69 = arith.constant 0.000000e+00 : f32
      %170 = vector.broadcast %cst_69 : f32 to vector<1x256xf32>
      %c2 = arith.constant 2 : index
      %171 = memref.load %arg2[%c2] : memref<98xf32, #tpu.memory_space<smem>>
      %172 = vector.broadcast %171 : f32 to vector<1x256xf32>
      %173 = arith.mulf %172, %31 : vector<1x256xf32>
      %174 = arith.addf %170, %173 : vector<1x256xf32>
      %c9 = arith.constant 9 : index
      %175 = memref.load %arg2[%c9] : memref<98xf32, #tpu.memory_space<smem>>
      %176 = vector.broadcast %175 : f32 to vector<1x256xf32>
      %177 = arith.mulf %176, %32 : vector<1x256xf32>
      %178 = arith.addf %174, %177 : vector<1x256xf32>
      %c16_70 = arith.constant 16 : index
      %179 = memref.load %arg2[%c16_70] : memref<98xf32, #tpu.memory_space<smem>>
      %180 = vector.broadcast %179 : f32 to vector<1x256xf32>
      %181 = arith.mulf %180, %33 : vector<1x256xf32>
      %182 = arith.addf %178, %181 : vector<1x256xf32>
      %c23 = arith.constant 23 : index
      %183 = memref.load %arg2[%c23] : memref<98xf32, #tpu.memory_space<smem>>
      %184 = vector.broadcast %183 : f32 to vector<1x256xf32>
      %185 = arith.mulf %184, %34 : vector<1x256xf32>
      %186 = arith.addf %182, %185 : vector<1x256xf32>
      %c30 = arith.constant 30 : index
      %187 = memref.load %arg2[%c30] : memref<98xf32, #tpu.memory_space<smem>>
      %188 = vector.broadcast %187 : f32 to vector<1x256xf32>
      %189 = arith.mulf %188, %35 : vector<1x256xf32>
      %190 = arith.addf %186, %189 : vector<1x256xf32>
      %c37 = arith.constant 37 : index
      %191 = memref.load %arg2[%c37] : memref<98xf32, #tpu.memory_space<smem>>
      %192 = vector.broadcast %191 : f32 to vector<1x256xf32>
      %193 = arith.mulf %192, %36 : vector<1x256xf32>
      %194 = arith.addf %190, %193 : vector<1x256xf32>
      %c44 = arith.constant 44 : index
      %195 = memref.load %arg2[%c44] : memref<98xf32, #tpu.memory_space<smem>>
      %196 = vector.broadcast %195 : f32 to vector<1x256xf32>
      %197 = arith.mulf %196, %37 : vector<1x256xf32>
      %198 = arith.addf %194, %197 : vector<1x256xf32>
      %c51 = arith.constant 51 : index
      %199 = memref.load %arg2[%c51] : memref<98xf32, #tpu.memory_space<smem>>
      %200 = vector.broadcast %199 : f32 to vector<1x256xf32>
      %201 = arith.mulf %200, %38 : vector<1x256xf32>
      %202 = arith.addf %198, %201 : vector<1x256xf32>
      %c58 = arith.constant 58 : index
      %203 = memref.load %arg2[%c58] : memref<98xf32, #tpu.memory_space<smem>>
      %204 = vector.broadcast %203 : f32 to vector<1x256xf32>
      %205 = arith.mulf %204, %39 : vector<1x256xf32>
      %206 = arith.addf %202, %205 : vector<1x256xf32>
      %c65 = arith.constant 65 : index
      %207 = memref.load %arg2[%c65] : memref<98xf32, #tpu.memory_space<smem>>
      %208 = vector.broadcast %207 : f32 to vector<1x256xf32>
      %209 = arith.mulf %208, %40 : vector<1x256xf32>
      %210 = arith.addf %206, %209 : vector<1x256xf32>
      %c72 = arith.constant 72 : index
      %211 = memref.load %arg2[%c72] : memref<98xf32, #tpu.memory_space<smem>>
      %212 = vector.broadcast %211 : f32 to vector<1x256xf32>
      %213 = arith.mulf %212, %41 : vector<1x256xf32>
      %214 = arith.addf %210, %213 : vector<1x256xf32>
      %c79 = arith.constant 79 : index
      %215 = memref.load %arg2[%c79] : memref<98xf32, #tpu.memory_space<smem>>
      %216 = vector.broadcast %215 : f32 to vector<1x256xf32>
      %217 = arith.mulf %216, %42 : vector<1x256xf32>
      %218 = arith.addf %214, %217 : vector<1x256xf32>
      %c86 = arith.constant 86 : index
      %219 = memref.load %arg2[%c86] : memref<98xf32, #tpu.memory_space<smem>>
      %220 = vector.broadcast %219 : f32 to vector<1x256xf32>
      %221 = arith.mulf %220, %43 : vector<1x256xf32>
      %222 = arith.addf %218, %221 : vector<1x256xf32>
      %c93 = arith.constant 93 : index
      %223 = memref.load %arg2[%c93] : memref<98xf32, #tpu.memory_space<smem>>
      %224 = vector.broadcast %223 : f32 to vector<1x256xf32>
      %225 = arith.mulf %224, %44 : vector<1x256xf32>
      %226 = arith.addf %222, %225 : vector<1x256xf32>
      %c0_71 = arith.constant 0 : index
      %c3_72 = arith.constant 3 : index
      %227 = vector.load %arg9[%c0_71, %c3_72] : memref<1x262xf32, #tpu.memory_space<vmem>>, vector<1x256xf32>
      tpu.vector_store %arg9[%c0_71, %c3_72], %226 {strides = array<i32>} : memref<1x262xf32, #tpu.memory_space<vmem>>, vector<1x256xf32>,
      %c0_73 = arith.constant 0 : index
      %c2_74 = arith.constant 2 : index
      %228 = vector.load %arg9[%c0_73, %c2_74] : memref<1x262xf32, #tpu.memory_space<vmem>>, vector<1x256xf32>
      %c2_75 = arith.constant 2 : index
      %c0_76 = arith.constant 0 : index
      %229 = vector.load %arg3[%c2_75, %c0_76] : memref<7x256xf32, #tpu.memory_space<vmem>>, vector<1x256xf32>
      %230 = arith.mulf %228, %229 : vector<1x256xf32>
      %231 = arith.addf %169, %230 : vector<1x256xf32>
      %cst_77 = arith.constant 0.000000e+00 : f32
      %232 = vector.broadcast %cst_77 : f32 to vector<1x256xf32>
      %c3_78 = arith.constant 3 : index
      %233 = memref.load %arg2[%c3_78] : memref<98xf32, #tpu.memory_space<smem>>
      %234 = vector.broadcast %233 : f32 to vector<1x256xf32>
      %235 = arith.mulf %234, %31 : vector<1x256xf32>
      %236 = arith.addf %232, %235 : vector<1x256xf32>
      %c10 = arith.constant 10 : index
      %237 = memref.load %arg2[%c10] : memref<98xf32, #tpu.memory_space<smem>>
      %238 = vector.broadcast %237 : f32 to vector<1x256xf32>
      %239 = arith.mulf %238, %32 : vector<1x256xf32>
      %240 = arith.addf %236, %239 : vector<1x256xf32>
      %c17 = arith.constant 17 : index
      %241 = memref.load %arg2[%c17] : memref<98xf32, #tpu.memory_space<smem>>
      %242 = vector.broadcast %241 : f32 to vector<1x256xf32>
      %243 = arith.mulf %242, %33 : vector<1x256xf32>
      %244 = arith.addf %240, %243 : vector<1x256xf32>
      %c24 = arith.constant 24 : index
      %245 = memref.load %arg2[%c24] : memref<98xf32, #tpu.memory_space<smem>>
      %246 = vector.broadcast %245 : f32 to vector<1x256xf32>
      %247 = arith.mulf %246, %34 : vector<1x256xf32>
      %248 = arith.addf %244, %247 : vector<1x256xf32>
      %c31 = arith.constant 31 : index
      %249 = memref.load %arg2[%c31] : memref<98xf32, #tpu.memory_space<smem>>
      %250 = vector.broadcast %249 : f32 to vector<1x256xf32>
      %251 = arith.mulf %250, %35 : vector<1x256xf32>
      %252 = arith.addf %248, %251 : vector<1x256xf32>
      %c38 = arith.constant 38 : index
      %253 = memref.load %arg2[%c38] : memref<98xf32, #tpu.memory_space<smem>>
      %254 = vector.broadcast %253 : f32 to vector<1x256xf32>
      %255 = arith.mulf %254, %36 : vector<1x256xf32>
      %256 = arith.addf %252, %255 : vector<1x256xf32>
      %c45 = arith.constant 45 : index
      %257 = memref.load %arg2[%c45] : memref<98xf32, #tpu.memory_space<smem>>
      %258 = vector.broadcast %257 : f32 to vector<1x256xf32>
      %259 = arith.mulf %258, %37 : vector<1x256xf32>
      %260 = arith.addf %256, %259 : vector<1x256xf32>
      %c52 = arith.constant 52 : index
      %261 = memref.load %arg2[%c52] : memref<98xf32, #tpu.memory_space<smem>>
      %262 = vector.broadcast %261 : f32 to vector<1x256xf32>
      %263 = arith.mulf %262, %38 : vector<1x256xf32>
      %264 = arith.addf %260, %263 : vector<1x256xf32>
      %c59 = arith.constant 59 : index
      %265 = memref.load %arg2[%c59] : memref<98xf32, #tpu.memory_space<smem>>
      %266 = vector.broadcast %265 : f32 to vector<1x256xf32>
      %267 = arith.mulf %266, %39 : vector<1x256xf32>
      %268 = arith.addf %264, %267 : vector<1x256xf32>
      %c66 = arith.constant 66 : index
      %269 = memref.load %arg2[%c66] : memref<98xf32, #tpu.memory_space<smem>>
      %270 = vector.broadcast %269 : f32 to vector<1x256xf32>
      %271 = arith.mulf %270, %40 : vector<1x256xf32>
      %272 = arith.addf %268, %271 : vector<1x256xf32>
      %c73 = arith.constant 73 : index
      %273 = memref.load %arg2[%c73] : memref<98xf32, #tpu.memory_space<smem>>
      %274 = vector.broadcast %273 : f32 to vector<1x256xf32>
      %275 = arith.mulf %274, %41 : vector<1x256xf32>
      %276 = arith.addf %272, %275 : vector<1x256xf32>
      %c80_79 = arith.constant 80 : index
      %277 = memref.load %arg2[%c80_79] : memref<98xf32, #tpu.memory_space<smem>>
      %278 = vector.broadcast %277 : f32 to vector<1x256xf32>
      %279 = arith.mulf %278, %42 : vector<1x256xf32>
      %280 = arith.addf %276, %279 : vector<1x256xf32>
      %c87 = arith.constant 87 : index
      %281 = memref.load %arg2[%c87] : memref<98xf32, #tpu.memory_space<smem>>
      %282 = vector.broadcast %281 : f32 to vector<1x256xf32>
      %283 = arith.mulf %282, %43 : vector<1x256xf32>
      %284 = arith.addf %280, %283 : vector<1x256xf32>
      %c94 = arith.constant 94 : index
      %285 = memref.load %arg2[%c94] : memref<98xf32, #tpu.memory_space<smem>>
      %286 = vector.broadcast %285 : f32 to vector<1x256xf32>
      %287 = arith.mulf %286, %44 : vector<1x256xf32>
      %288 = arith.addf %284, %287 : vector<1x256xf32>
      %c0_80 = arith.constant 0 : index
      %c3_81 = arith.constant 3 : index
      %289 = vector.load %arg9[%c0_80, %c3_81] : memref<1x262xf32, #tpu.memory_space<vmem>>, vector<1x256xf32>
      tpu.vector_store %arg9[%c0_80, %c3_81], %288 {strides = array<i32>} : memref<1x262xf32, #tpu.memory_space<vmem>>, vector<1x256xf32>,
      %c0_82 = arith.constant 0 : index
      %c3_83 = arith.constant 3 : index
      %290 = vector.load %arg9[%c0_82, %c3_83] : memref<1x262xf32, #tpu.memory_space<vmem>>, vector<1x256xf32>
      %c3_84 = arith.constant 3 : index
      %c0_85 = arith.constant 0 : index
      %291 = vector.load %arg3[%c3_84, %c0_85] : memref<7x256xf32, #tpu.memory_space<vmem>>, vector<1x256xf32>
      %292 = arith.mulf %290, %291 : vector<1x256xf32>
      %293 = arith.addf %231, %292 : vector<1x256xf32>
      %cst_86 = arith.constant 0.000000e+00 : f32
      %294 = vector.broadcast %cst_86 : f32 to vector<1x256xf32>
      %c4 = arith.constant 4 : index
      %295 = memref.load %arg2[%c4] : memref<98xf32, #tpu.memory_space<smem>>
      %296 = vector.broadcast %295 : f32 to vector<1x256xf32>
      %297 = arith.mulf %296, %31 : vector<1x256xf32>
      %298 = arith.addf %294, %297 : vector<1x256xf32>
      %c11 = arith.constant 11 : index
      %299 = memref.load %arg2[%c11] : memref<98xf32, #tpu.memory_space<smem>>
      %300 = vector.broadcast %299 : f32 to vector<1x256xf32>
      %301 = arith.mulf %300, %32 : vector<1x256xf32>
      %302 = arith.addf %298, %301 : vector<1x256xf32>
      %c18 = arith.constant 18 : index
      %303 = memref.load %arg2[%c18] : memref<98xf32, #tpu.memory_space<smem>>
      %304 = vector.broadcast %303 : f32 to vector<1x256xf32>
      %305 = arith.mulf %304, %33 : vector<1x256xf32>
      %306 = arith.addf %302, %305 : vector<1x256xf32>
      %c25 = arith.constant 25 : index
      %307 = memref.load %arg2[%c25] : memref<98xf32, #tpu.memory_space<smem>>
      %308 = vector.broadcast %307 : f32 to vector<1x256xf32>
      %309 = arith.mulf %308, %34 : vector<1x256xf32>
      %310 = arith.addf %306, %309 : vector<1x256xf32>
      %c32_87 = arith.constant 32 : index
      %311 = memref.load %arg2[%c32_87] : memref<98xf32, #tpu.memory_space<smem>>
      %312 = vector.broadcast %311 : f32 to vector<1x256xf32>
      %313 = arith.mulf %312, %35 : vector<1x256xf32>
      %314 = arith.addf %310, %313 : vector<1x256xf32>
      %c39 = arith.constant 39 : index
      %315 = memref.load %arg2[%c39] : memref<98xf32, #tpu.memory_space<smem>>
      %316 = vector.broadcast %315 : f32 to vector<1x256xf32>
      %317 = arith.mulf %316, %36 : vector<1x256xf32>
      %318 = arith.addf %314, %317 : vector<1x256xf32>
      %c46 = arith.constant 46 : index
      %319 = memref.load %arg2[%c46] : memref<98xf32, #tpu.memory_space<smem>>
      %320 = vector.broadcast %319 : f32 to vector<1x256xf32>
      %321 = arith.mulf %320, %37 : vector<1x256xf32>
      %322 = arith.addf %318, %321 : vector<1x256xf32>
      %c53 = arith.constant 53 : index
      %323 = memref.load %arg2[%c53] : memref<98xf32, #tpu.memory_space<smem>>
      %324 = vector.broadcast %323 : f32 to vector<1x256xf32>
      %325 = arith.mulf %324, %38 : vector<1x256xf32>
      %326 = arith.addf %322, %325 : vector<1x256xf32>
      %c60 = arith.constant 60 : index
      %327 = memref.load %arg2[%c60] : memref<98xf32, #tpu.memory_space<smem>>
      %328 = vector.broadcast %327 : f32 to vector<1x256xf32>
      %329 = arith.mulf %328, %39 : vector<1x256xf32>
      %330 = arith.addf %326, %329 : vector<1x256xf32>
      %c67 = arith.constant 67 : index
      %331 = memref.load %arg2[%c67] : memref<98xf32, #tpu.memory_space<smem>>
      %332 = vector.broadcast %331 : f32 to vector<1x256xf32>
      %333 = arith.mulf %332, %40 : vector<1x256xf32>
      %334 = arith.addf %330, %333 : vector<1x256xf32>
      %c74 = arith.constant 74 : index
      %335 = memref.load %arg2[%c74] : memref<98xf32, #tpu.memory_space<smem>>
      %336 = vector.broadcast %335 : f32 to vector<1x256xf32>
      %337 = arith.mulf %336, %41 : vector<1x256xf32>
      %338 = arith.addf %334, %337 : vector<1x256xf32>
      %c81 = arith.constant 81 : index
      %339 = memref.load %arg2[%c81] : memref<98xf32, #tpu.memory_space<smem>>
      %340 = vector.broadcast %339 : f32 to vector<1x256xf32>
      %341 = arith.mulf %340, %42 : vector<1x256xf32>
      %342 = arith.addf %338, %341 : vector<1x256xf32>
      %c88 = arith.constant 88 : index
      %343 = memref.load %arg2[%c88] : memref<98xf32, #tpu.memory_space<smem>>
      %344 = vector.broadcast %343 : f32 to vector<1x256xf32>
      %345 = arith.mulf %344, %43 : vector<1x256xf32>
      %346 = arith.addf %342, %345 : vector<1x256xf32>
      %c95 = arith.constant 95 : index
      %347 = memref.load %arg2[%c95] : memref<98xf32, #tpu.memory_space<smem>>
      %348 = vector.broadcast %347 : f32 to vector<1x256xf32>
      %349 = arith.mulf %348, %44 : vector<1x256xf32>
      %350 = arith.addf %346, %349 : vector<1x256xf32>
      %c0_88 = arith.constant 0 : index
      %c3_89 = arith.constant 3 : index
      %351 = vector.load %arg9[%c0_88, %c3_89] : memref<1x262xf32, #tpu.memory_space<vmem>>, vector<1x256xf32>
      tpu.vector_store %arg9[%c0_88, %c3_89], %350 {strides = array<i32>} : memref<1x262xf32, #tpu.memory_space<vmem>>, vector<1x256xf32>,
      %c0_90 = arith.constant 0 : index
      %c4_91 = arith.constant 4 : index
      %352 = vector.load %arg9[%c0_90, %c4_91] : memref<1x262xf32, #tpu.memory_space<vmem>>, vector<1x256xf32>
      %c4_92 = arith.constant 4 : index
      %c0_93 = arith.constant 0 : index
      %353 = vector.load %arg3[%c4_92, %c0_93] : memref<7x256xf32, #tpu.memory_space<vmem>>, vector<1x256xf32>
      %354 = arith.mulf %352, %353 : vector<1x256xf32>
      %355 = arith.addf %293, %354 : vector<1x256xf32>
      %cst_94 = arith.constant 0.000000e+00 : f32
      %356 = vector.broadcast %cst_94 : f32 to vector<1x256xf32>
      %c5 = arith.constant 5 : index
      %357 = memref.load %arg2[%c5] : memref<98xf32, #tpu.memory_space<smem>>
      %358 = vector.broadcast %357 : f32 to vector<1x256xf32>
      %359 = arith.mulf %358, %31 : vector<1x256xf32>
      %360 = arith.addf %356, %359 : vector<1x256xf32>
      %c12 = arith.constant 12 : index
      %361 = memref.load %arg2[%c12] : memref<98xf32, #tpu.memory_space<smem>>
      %362 = vector.broadcast %361 : f32 to vector<1x256xf32>
      %363 = arith.mulf %362, %32 : vector<1x256xf32>
      %364 = arith.addf %360, %363 : vector<1x256xf32>
      %c19 = arith.constant 19 : index
      %365 = memref.load %arg2[%c19] : memref<98xf32, #tpu.memory_space<smem>>
      %366 = vector.broadcast %365 : f32 to vector<1x256xf32>
      %367 = arith.mulf %366, %33 : vector<1x256xf32>
      %368 = arith.addf %364, %367 : vector<1x256xf32>
      %c26 = arith.constant 26 : index
      %369 = memref.load %arg2[%c26] : memref<98xf32, #tpu.memory_space<smem>>
      %370 = vector.broadcast %369 : f32 to vector<1x256xf32>
      %371 = arith.mulf %370, %34 : vector<1x256xf32>
      %372 = arith.addf %368, %371 : vector<1x256xf32>
      %c33 = arith.constant 33 : index
      %373 = memref.load %arg2[%c33] : memref<98xf32, #tpu.memory_space<smem>>
      %374 = vector.broadcast %373 : f32 to vector<1x256xf32>
      %375 = arith.mulf %374, %35 : vector<1x256xf32>
      %376 = arith.addf %372, %375 : vector<1x256xf32>
      %c40 = arith.constant 40 : index
      %377 = memref.load %arg2[%c40] : memref<98xf32, #tpu.memory_space<smem>>
      %378 = vector.broadcast %377 : f32 to vector<1x256xf32>
      %379 = arith.mulf %378, %36 : vector<1x256xf32>
      %380 = arith.addf %376, %379 : vector<1x256xf32>
      %c47 = arith.constant 47 : index
      %381 = memref.load %arg2[%c47] : memref<98xf32, #tpu.memory_space<smem>>
      %382 = vector.broadcast %381 : f32 to vector<1x256xf32>
      %383 = arith.mulf %382, %37 : vector<1x256xf32>
      %384 = arith.addf %380, %383 : vector<1x256xf32>
      %c54 = arith.constant 54 : index
      %385 = memref.load %arg2[%c54] : memref<98xf32, #tpu.memory_space<smem>>
      %386 = vector.broadcast %385 : f32 to vector<1x256xf32>
      %387 = arith.mulf %386, %38 : vector<1x256xf32>
      %388 = arith.addf %384, %387 : vector<1x256xf32>
      %c61 = arith.constant 61 : index
      %389 = memref.load %arg2[%c61] : memref<98xf32, #tpu.memory_space<smem>>
      %390 = vector.broadcast %389 : f32 to vector<1x256xf32>
      %391 = arith.mulf %390, %39 : vector<1x256xf32>
      %392 = arith.addf %388, %391 : vector<1x256xf32>
      %c68 = arith.constant 68 : index
      %393 = memref.load %arg2[%c68] : memref<98xf32, #tpu.memory_space<smem>>
      %394 = vector.broadcast %393 : f32 to vector<1x256xf32>
      %395 = arith.mulf %394, %40 : vector<1x256xf32>
      %396 = arith.addf %392, %395 : vector<1x256xf32>
      %c75 = arith.constant 75 : index
      %397 = memref.load %arg2[%c75] : memref<98xf32, #tpu.memory_space<smem>>
      %398 = vector.broadcast %397 : f32 to vector<1x256xf32>
      %399 = arith.mulf %398, %41 : vector<1x256xf32>
      %400 = arith.addf %396, %399 : vector<1x256xf32>
      %c82 = arith.constant 82 : index
      %401 = memref.load %arg2[%c82] : memref<98xf32, #tpu.memory_space<smem>>
      %402 = vector.broadcast %401 : f32 to vector<1x256xf32>
      %403 = arith.mulf %402, %42 : vector<1x256xf32>
      %404 = arith.addf %400, %403 : vector<1x256xf32>
      %c89 = arith.constant 89 : index
      %405 = memref.load %arg2[%c89] : memref<98xf32, #tpu.memory_space<smem>>
      %406 = vector.broadcast %405 : f32 to vector<1x256xf32>
      %407 = arith.mulf %406, %43 : vector<1x256xf32>
      %408 = arith.addf %404, %407 : vector<1x256xf32>
      %c96_95 = arith.constant 96 : index
      %409 = memref.load %arg2[%c96_95] : memref<98xf32, #tpu.memory_space<smem>>
      %410 = vector.broadcast %409 : f32 to vector<1x256xf32>
      %411 = arith.mulf %410, %44 : vector<1x256xf32>
      %412 = arith.addf %408, %411 : vector<1x256xf32>
      %c0_96 = arith.constant 0 : index
      %c3_97 = arith.constant 3 : index
      %413 = vector.load %arg9[%c0_96, %c3_97] : memref<1x262xf32, #tpu.memory_space<vmem>>, vector<1x256xf32>
      tpu.vector_store %arg9[%c0_96, %c3_97], %412 {strides = array<i32>} : memref<1x262xf32, #tpu.memory_space<vmem>>, vector<1x256xf32>,
      %c0_98 = arith.constant 0 : index
      %c5_99 = arith.constant 5 : index
      %414 = vector.load %arg9[%c0_98, %c5_99] : memref<1x262xf32, #tpu.memory_space<vmem>>, vector<1x256xf32>
      %c5_100 = arith.constant 5 : index
      %c0_101 = arith.constant 0 : index
      %415 = vector.load %arg3[%c5_100, %c0_101] : memref<7x256xf32, #tpu.memory_space<vmem>>, vector<1x256xf32>
      %416 = arith.mulf %414, %415 : vector<1x256xf32>
      %417 = arith.addf %355, %416 : vector<1x256xf32>
      %cst_102 = arith.constant 0.000000e+00 : f32
      %418 = vector.broadcast %cst_102 : f32 to vector<1x256xf32>
      %c6 = arith.constant 6 : index
      %419 = memref.load %arg2[%c6] : memref<98xf32, #tpu.memory_space<smem>>
      %420 = vector.broadcast %419 : f32 to vector<1x256xf32>
      %421 = arith.mulf %420, %31 : vector<1x256xf32>
      %422 = arith.addf %418, %421 : vector<1x256xf32>
      %c13 = arith.constant 13 : index
      %423 = memref.load %arg2[%c13] : memref<98xf32, #tpu.memory_space<smem>>
      %424 = vector.broadcast %423 : f32 to vector<1x256xf32>
      %425 = arith.mulf %424, %32 : vector<1x256xf32>
      %426 = arith.addf %422, %425 : vector<1x256xf32>
      %c20 = arith.constant 20 : index
      %427 = memref.load %arg2[%c20] : memref<98xf32, #tpu.memory_space<smem>>
      %428 = vector.broadcast %427 : f32 to vector<1x256xf32>
      %429 = arith.mulf %428, %33 : vector<1x256xf32>
      %430 = arith.addf %426, %429 : vector<1x256xf32>
      %c27 = arith.constant 27 : index
      %431 = memref.load %arg2[%c27] : memref<98xf32, #tpu.memory_space<smem>>
      %432 = vector.broadcast %431 : f32 to vector<1x256xf32>
      %433 = arith.mulf %432, %34 : vector<1x256xf32>
      %434 = arith.addf %430, %433 : vector<1x256xf32>
      %c34 = arith.constant 34 : index
      %435 = memref.load %arg2[%c34] : memref<98xf32, #tpu.memory_space<smem>>
      %436 = vector.broadcast %435 : f32 to vector<1x256xf32>
      %437 = arith.mulf %436, %35 : vector<1x256xf32>
      %438 = arith.addf %434, %437 : vector<1x256xf32>
      %c41 = arith.constant 41 : index
      %439 = memref.load %arg2[%c41] : memref<98xf32, #tpu.memory_space<smem>>
      %440 = vector.broadcast %439 : f32 to vector<1x256xf32>
      %441 = arith.mulf %440, %36 : vector<1x256xf32>
      %442 = arith.addf %438, %441 : vector<1x256xf32>
      %c48_103 = arith.constant 48 : index
      %443 = memref.load %arg2[%c48_103] : memref<98xf32, #tpu.memory_space<smem>>
      %444 = vector.broadcast %443 : f32 to vector<1x256xf32>
      %445 = arith.mulf %444, %37 : vector<1x256xf32>
      %446 = arith.addf %442, %445 : vector<1x256xf32>
      %c55 = arith.constant 55 : index
      %447 = memref.load %arg2[%c55] : memref<98xf32, #tpu.memory_space<smem>>
      %448 = vector.broadcast %447 : f32 to vector<1x256xf32>
      %449 = arith.mulf %448, %38 : vector<1x256xf32>
      %450 = arith.addf %446, %449 : vector<1x256xf32>
      %c62 = arith.constant 62 : index
      %451 = memref.load %arg2[%c62] : memref<98xf32, #tpu.memory_space<smem>>
      %452 = vector.broadcast %451 : f32 to vector<1x256xf32>
      %453 = arith.mulf %452, %39 : vector<1x256xf32>
      %454 = arith.addf %450, %453 : vector<1x256xf32>
      %c69 = arith.constant 69 : index
      %455 = memref.load %arg2[%c69] : memref<98xf32, #tpu.memory_space<smem>>
      %456 = vector.broadcast %455 : f32 to vector<1x256xf32>
      %457 = arith.mulf %456, %40 : vector<1x256xf32>
      %458 = arith.addf %454, %457 : vector<1x256xf32>
      %c76 = arith.constant 76 : index
      %459 = memref.load %arg2[%c76] : memref<98xf32, #tpu.memory_space<smem>>
      %460 = vector.broadcast %459 : f32 to vector<1x256xf32>
      %461 = arith.mulf %460, %41 : vector<1x256xf32>
      %462 = arith.addf %458, %461 : vector<1x256xf32>
      %c83 = arith.constant 83 : index
      %463 = memref.load %arg2[%c83] : memref<98xf32, #tpu.memory_space<smem>>
      %464 = vector.broadcast %463 : f32 to vector<1x256xf32>
      %465 = arith.mulf %464, %42 : vector<1x256xf32>
      %466 = arith.addf %462, %465 : vector<1x256xf32>
      %c90 = arith.constant 90 : index
      %467 = memref.load %arg2[%c90] : memref<98xf32, #tpu.memory_space<smem>>
      %468 = vector.broadcast %467 : f32 to vector<1x256xf32>
      %469 = arith.mulf %468, %43 : vector<1x256xf32>
      %470 = arith.addf %466, %469 : vector<1x256xf32>
      %c97 = arith.constant 97 : index
      %471 = memref.load %arg2[%c97] : memref<98xf32, #tpu.memory_space<smem>>
      %472 = vector.broadcast %471 : f32 to vector<1x256xf32>
      %473 = arith.mulf %472, %44 : vector<1x256xf32>
      %474 = arith.addf %470, %473 : vector<1x256xf32>
      %c0_104 = arith.constant 0 : index
      %c3_105 = arith.constant 3 : index
      %475 = vector.load %arg9[%c0_104, %c3_105] : memref<1x262xf32, #tpu.memory_space<vmem>>, vector<1x256xf32>
      tpu.vector_store %arg9[%c0_104, %c3_105], %474 {strides = array<i32>} : memref<1x262xf32, #tpu.memory_space<vmem>>, vector<1x256xf32>,
      %c0_106 = arith.constant 0 : index
      %c6_107 = arith.constant 6 : index
      %476 = vector.load %arg9[%c0_106, %c6_107] : memref<1x262xf32, #tpu.memory_space<vmem>>, vector<1x256xf32>
      %c6_108 = arith.constant 6 : index
      %c0_109 = arith.constant 0 : index
      %477 = vector.load %arg3[%c6_108, %c0_109] : memref<7x256xf32, #tpu.memory_space<vmem>>, vector<1x256xf32>
      %478 = arith.mulf %476, %477 : vector<1x256xf32>
      %479 = arith.addf %417, %478 : vector<1x256xf32>
      %480 = arith.negf %479 : vector<1x256xf32>
      %481 = math.exp %480 : vector<1x256xf32>
      %cst_110 = arith.constant 1.000000e+00 : f32
      %482 = vector.broadcast %cst_110 : f32 to vector<1x256xf32>
      %483 = arith.addf %482, %481 : vector<1x256xf32>
      %484 = arith.divf %482, %483 : vector<1x256xf32>
      %c0_111 = arith.constant 0 : index
      %c0_112 = arith.constant 0 : index
      %c0_113 = arith.constant 0 : index
      %485 = vector.load %arg5[%c0_111, %c0_112, %c0_113] : memref<1x1x256xf32, #tpu.memory_space<vmem>>, vector<1x1x256xf32>
      %486 = vector.shape_cast %485 : vector<1x1x256xf32> to vector<1x256xf32>
      %487 = vector.shape_cast %484 : vector<1x256xf32> to vector<1x1x256xf32>
      tpu.vector_store %arg5[%c0_111, %c0_112, %c0_113], %487 {strides = array<i32>} : memref<1x1x256xf32, #tpu.memory_space<vmem>>, vector<1x1x256xf32>,
    } else {
    }
    return
  }
  func.func @transform_0(%arg0: i32, %arg1: i32) -> i32 {
    %c0_i32 = arith.constant 0 : i32
    %c0_i32_0 = arith.constant 0 : i32
    return %c0_i32 : i32
  }
  func.func @transform_1(%arg0: i32, %arg1: i32) -> (i32, i32) {
    %c0_i32 = arith.constant 0 : i32
    %c0_i32_0 = arith.constant 0 : i32
    %c0_i32_1 = arith.constant 0 : i32
    return %c0_i32, %c0_i32_0 : i32, i32
  }
  func.func @transform_2(%arg0: i32, %arg1: i32) -> (i32, i32, i32) {
    %c0_i32 = arith.constant 0 : i32
    %c0_i32_0 = arith.constant 0 : i32
    return %arg0, %arg1, %c0_i32 : i32, i32, i32
  }
  func.func @transform_3(%arg0: i32, %arg1: i32) -> (i32, i32, i32) {
    %c0_i32 = arith.constant 0 : i32
    %c0_i32_0 = arith.constant 0 : i32
    %c0_i32_1 = arith.constant 0 : i32
    return %arg0, %c0_i32, %c0_i32_0 : i32, i32, i32
  }
}

</mosaic_0001>

<llo_original>
// kernel: tpu_custom_call.1
$region0: #{tpu_custom_call.1}
  #allocation0 [shape = 'u32[]', space=smem, size = 0x4, offset = 0x4, fixed_abs, tag = 'smem constant byte address 0x4 - core index']
  #allocation1 [shape = 'u32[144,128]{1,0:T(1,128)}', space=vmem, size = 0x12000, scoped, tag = 'internal scratch']
  #allocation2 [shape = 'f32[1,256]{1,0:T(1,128)}', space=vmem, size = 0x400, scoped, tag = 'scratch operand']
  #allocation3 [shape = 'f32[1,256]{1,0:T(1,128)}', space=vmem, size = 0x400, scoped, tag = 'scratch operand']
  #allocation4 [shape = 'f32[2,352]{1,0:T(2,128)}', space=vmem, size = 0xc00, scoped, tag = 'scratch operand']
  #allocation5 [shape = 'f32[1,262]{1,0:T(1,128)}', space=vmem, size = 0x600, scoped, tag = 'scratch operand']
  %s0 = inlined_call_operand.hbm [shape: f32[98], index: 0, kind: input, shape index: {}]
  %s1 = inlined_call_operand.hbm [shape: f32[7,256], index: 1, kind: input, shape index: {}]
  %s2 = inlined_call_operand.hbm [shape: f32[2,16,256], index: 2, kind: input, shape index: {}]
  %s3 = inlined_call_operand.hbm [shape: f32[2,1,256], index: 3, kind: output, shape index: {}]
  %s4 = sld [smem:[#allocation0]]
  $region65: #{tpu_custom_call.1} parent=0
    _
  %s6 = ssub.s32 1, %s4
  %s7 = scalar_select 0, %s6, %s4
  $region1: #{tpu_custom_call.1} parent=0
    #allocation6 [shape = 'u8[512]{0}', space=smem, size = 0x200, scoped, tag = 'input window, operand 0, single buffered']
    #allocation7 [shape = 's32[2]{0}', space=sflag, size = 0x8, scoped, tag = 'scoped memory for tpu_custom_call.1']
    #allocation8 [shape = 's32[2]{0}', space=sflag, size = 0x8, scoped, tag = 'scoped memory for tpu_custom_call.1']
    #allocation9 [shape = 's32[2]{0}', space=sflag, size = 0x8, scoped, tag = 'scoped memory for tpu_custom_call.1']
    #allocation10 [shape = 'u8[8192]{0}', space=vmem, size = 0x2000, scoped, tag = 'input window, operand 1, single buffered']
    #allocation11 [shape = 'u8[16384]{0}', space=vmem, size = 0x4000, scoped, tag = 'input window, operand 2']
    #allocation12 [shape = 's32[2]{0}', space=sflag, size = 0x8, scoped, tag = 'scoped memory for tpu_custom_call.1']
    #allocation13 [shape = 'u8[2048]{0}', space=vmem, size = 0x800, scoped, tag = 'output window, operand 0']
    %8 = vsyncpa [#allocation9], 0
    %9 = vsyncpa [#allocation7], 0
    %10 = vsyncpa [#allocation12], 0
    %s11 = scalar_lea.sflag [#allocation12], 1
    %12 = vsyncpa %s11, 0
    %13 = vsyncpa [#allocation8], 0
    %s14 = scalar_lea.sflag [#allocation8], 1
    %15 = vsyncpa %s14, 0
    loop: start=0, step=1, limit=6
    $region2: #{tpu_custom_call.1} parent=1 // loop_pre_header
      _
    $region3: #{tpu_custom_call.1} parent=1 // loop_header
      %s17 = sphi 0, %s21
      %p18 = scmp.ge.s32.totalorder %s17, 6
      %s24 = sphi 0, %s36
      %s25 = sphi 0, %s32
      %s26 = sphi 0, %s24
      %s27 = sphi 0, %s25
      %s28 = sphi 0, %s26
      %s29 = sphi 0, %s27
      %s37 = sphi 0, %s37
      %s39 = sphi 0, %s37
      %s40 = sphi 0, %s39
      %s54 = sphi 0, %s40
      %s58 = sphi 0, %s58
      %s60 = sphi 0, %s58
      %s61 = sphi 0, %s60
      %s75 = sphi 0, %s61
      %s83 = sphi 0, %s85
      %s86 = sphi 0, %s83
      %s87 = sphi 0, %s86
      %s103 = sphi 0, %s87
      %s109 = sphi 0, %s111
      %s112 = sphi 0, %s109
      %s113 = sphi 0, %s112
      %s129 = sphi 0, %s113
    $region4: #{tpu_custom_call.1} parent=1 // loop_header_branch
      %20 = sbr.rel (%p18) target = $region8
    $region5: #{tpu_custom_call.1} parent=1 // loop_body
      %s22 = ssub.s32 %s17, 1
      %s23 = ssub.s32 %s17, 2
      %s30 = sadd.s32 1, %s25
      %p31 = scmp.ge.s32.totalorder %s30, 2
      %s32 = scalar_select %p31, 0, %s30
      %s33 = sadd.s32 1, %s24
      %s34 = scalar_select %p31, %s33, %s24
      %p35 = scmp.ge.s32.totalorder %s34, 2
      %s36 = scalar_select %p35, 0, %s34
      %s38 = sadd.s32 %s37, 1
      %p41 = scmp.eq.s32.totalorder %s17, 3
      %p42 = scmp.ne.s32.totalorder %s37, %s39
      %p43 = scmp.eq.s32.totalorder %s17, 0
      %p44 = por %p42, %p43
      %p45 = scmp.ne.s32.totalorder %s37, %s39
      %p46 = scmp.eq.s32.totalorder %s22, 3
      %p47 = por %p45, %p46
      %p48 = scmp.ne.s32.totalorder %s39, %s40
      %p49 = scmp.eq.s32.totalorder %s22, 0
      %p50 = por %p48, %p49
      %p51 = scmp.ne.s32.totalorder %s39, %s40
      %p52 = scmp.eq.s32.totalorder %s23, 3
      %p53 = por %p51, %p52
      %p55 = scmp.ne.s32.totalorder %s40, %s54
      %p56 = scmp.eq.s32.totalorder %s23, 0
      %p57 = por %p55, %p56
      %s59 = sadd.s32 %s58, 1
      %p62 = scmp.eq.s32.totalorder %s17, 3
      %p63 = scmp.ne.s32.totalorder %s58, %s60
      %p64 = scmp.eq.s32.totalorder %s17, 0
      %p65 = por %p63, %p64
      %p66 = scmp.ne.s32.totalorder %s58, %s60
      %p67 = scmp.eq.s32.totalorder %s22, 3
      %p68 = por %p66, %p67
      %p69 = scmp.ne.s32.totalorder %s60, %s61
      %p70 = scmp.eq.s32.totalorder %s22, 0
      %p71 = por %p69, %p70
      %p72 = scmp.ne.s32.totalorder %s60, %s61
      %p73 = scmp.eq.s32.totalorder %s23, 3
      %p74 = por %p72, %p73
      %p76 = scmp.ne.s32.totalorder %s61, %s75
      %p77 = scmp.eq.s32.totalorder %s23, 0
      %p78 = por %p76, %p77
      %s79 = ssub.s32 %s24, %s36
      %s80 = ssub.s32 %s25, %s32
      %s81 = sor.u32 %s79, %s80
      %p82 = scmp.eq.s32.totalorder %s81, 0
      %s84 = sadd.s32 %s83, 1
      %s85 = scalar_select %p82, %s83, %s84
      %p88 = pneg %p82
      %p89 = scmp.eq.s32.totalorder %s17, 3
      %p90 = por %p88, %p89
      %p91 = scmp.ne.s32.totalorder %s83, %s86
      %p92 = scmp.eq.s32.totalorder %s17, 0
      %p93 = por %p91, %p92
      %p94 = scmp.ne.s32.totalorder %s83, %s86
      %p95 = scmp.eq.s32.totalorder %s22, 3
      %p96 = por %p94, %p95
      %p97 = scmp.ne.s32.totalorder %s86, %s87
      %p98 = scmp.eq.s32.totalorder %s22, 0
      %p99 = por %p97, %p98
      %p100 = scmp.ne.s32.totalorder %s86, %s87
      %p101 = scmp.eq.s32.totalorder %s23, 3
      %p102 = por %p100, %p101
      %p104 = scmp.ne.s32.totalorder %s87, %s103
      %p105 = scmp.eq.s32.totalorder %s23, 0
      %p106 = por %p104, %p105
      %s107 = ssub.s32 %s24, %s36
      %p108 = scmp.eq.s32.totalorder %s107, 0
      %s110 = sadd.s32 %s109, 1
      %s111 = scalar_select %p108, %s109, %s110
      %p114 = pneg %p108
      %p115 = scmp.eq.s32.totalorder %s17, 3
      %p116 = por %p114, %p115
      %p117 = scmp.ne.s32.totalorder %s109, %s112
      %p118 = scmp.eq.s32.totalorder %s17, 0
      %p119 = por %p117, %p118
      %p120 = scmp.ne.s32.totalorder %s109, %s112
      %p121 = scmp.eq.s32.totalorder %s22, 3
      %p122 = por %p120, %p121
      %p123 = scmp.ne.s32.totalorder %s112, %s113
      %p124 = scmp.eq.s32.totalorder %s22, 0
      %p125 = por %p123, %p124
      %p126 = scmp.ne.s32.totalorder %s112, %s113
      %p127 = scmp.eq.s32.totalorder %s23, 3
      %p128 = por %p126, %p127
      %p130 = scmp.ne.s32.totalorder %s113, %s129
      %p131 = scmp.eq.s32.totalorder %s23, 0
      %p132 = por %p130, %p131
      %p133 = scmp.le.s32.totalorder 1, %s17
      %p134 = scmp.lt.s32.totalorder %s17, 5
      %p135 = pnand %p133, %p134
      %p136 = pneg %p135
      // Predicated region
      $region9: #{tpu_custom_call.1} parent=5 // pred_check
        _
      $region10: #{tpu_custom_call.1} parent=5 // pred_check_branch
        %138 = sbr.rel (%p135) target = $region12
      $region11: #{tpu_custom_call.1} parent=5 // pred_region
        %s139 = ssub.s32 %s17, 1
        // Predicated region
        $region13: #{tpu_custom_call.1} parent=11 // pred_check
          %p140 = pneg %p50
        $region14: #{tpu_custom_call.1} parent=11 // pred_check_branch
          %142 = sbr.rel (%p140) target = $region16
        $region15: #{tpu_custom_call.1} parent=11 // pred_region
          %s144 = ssub.s32 16, 16
          %145 = vsyncadd [#allocation9], %s144
          %148 = dma.hbm_to_smem %s0, 16, [#allocation6], [#allocation9]
        $region16: #{tpu_custom_call.1} parent=11 // pred_fallthru
          _
        // Predicated region
        $region17: #{tpu_custom_call.1} parent=11 // pred_check
          %p149 = pneg %p71
        $region18: #{tpu_custom_call.1} parent=11 // pred_check_branch
          %151 = sbr.rel (%p149) target = $region20
        $region19: #{tpu_custom_call.1} parent=11 // pred_region
          %s153 = ssub.s32 256, 256
          %154 = vsyncadd [#allocation7], %s153
          %s156 = sshll.u32 [#allocation10], 4
          %s157 = int_to_ptr.vmem [resolvable:$true] %s156
          %159 = dma.hbm_to_vmem [thread:$0]  %s1, 256, %s157, [#allocation7]
        $region20: #{tpu_custom_call.1} parent=11 // pred_fallthru
          _
      $region12: #{tpu_custom_call.1} parent=5 // pred_fallthru
        _
      %p160 = scmp.lt.s32.totalorder %s17, 4
      // Predicated region
      $region21: #{tpu_custom_call.1} parent=5 // pred_check
        %p161 = pneg %p160
      $region22: #{tpu_custom_call.1} parent=5 // pred_check_branch
        %163 = sbr.rel (%p161) target = $region24
      $region23: #{tpu_custom_call.1} parent=5 // pred_region
        // Predicated region
        $region25: #{tpu_custom_call.1} parent=23 // pred_check
          %p164 = pneg %p93
        $region26: #{tpu_custom_call.1} parent=23 // pred_check_branch
          %166 = sbr.rel (%p164) target = $region28
        $region27: #{tpu_custom_call.1} parent=23 // pred_region
          %s167 = sand.u32 %s83, 1
          %s168 = scalar_lea.sflag [#allocation12], %s167
          %s169 = sand.u32 %s83, 1
          %s170 = smul.addr %s169, 16
          %s171 = scalar_lea.vmem [#allocation11], %s170
          %s173 = ssub.s32 256, 256
          %174 = vsyncadd %s168, %s173
          %s175 = smul.addr %s25, 2
          %s176 = smul.addr %s24, 4
          %s177 = sadd.s32 %s175, %s176
          %s178 = smul.addr %s177, 128
          %s179 = scalar_lea.hbm %s2, %s178
          %s181 = sshll.u32 %s171, 4
          %s182 = int_to_ptr.vmem [resolvable:$true] %s181
          %184 = dma.hbm_to_vmem [thread:$0]  %s179, 256, %s182, %s168
        $region28: #{tpu_custom_call.1} parent=23 // pred_fallthru
          _
      $region24: #{tpu_custom_call.1} parent=5 // pred_fallthru
        _
      %p185 = scmp.le.s32.totalorder 1, %s17
      %p186 = scmp.lt.s32.totalorder %s17, 5
      %p187 = pnand %p185, %p186
      %p188 = pneg %p187
      // Predicated region
      $region29: #{tpu_custom_call.1} parent=5 // pred_check
        _
      $region30: #{tpu_custom_call.1} parent=5 // pred_check_branch
        %190 = sbr.rel (%p187) target = $region32
      $region31: #{tpu_custom_call.1} parent=5 // pred_region
        %s191 = ssub.s32 %s17, 1
        // Predicated region
        $region33: #{tpu_custom_call.1} parent=31 // pred_check
          %p192 = pneg %p50
        $region34: #{tpu_custom_call.1} parent=31 // pred_check_branch
          %194 = sbr.rel (%p192) target = $region36
        $region35: #{tpu_custom_call.1} parent=31 // pred_region
          %195 = dma.done [#allocation9], 16
        $region36: #{tpu_custom_call.1} parent=31 // pred_fallthru
          _
        // Predicated region
        $region37: #{tpu_custom_call.1} parent=31 // pred_check
          %p196 = pneg %p71
        $region38: #{tpu_custom_call.1} parent=31 // pred_check_branch
          %198 = sbr.rel (%p196) target = $region40
        $region39: #{tpu_custom_call.1} parent=31 // pred_region
          %199 = dma.done [#allocation7], 256
        $region40: #{tpu_custom_call.1} parent=31 // pred_fallthru
          _
        %s200 = sand.u32 %s86, 1
        %s201 = scalar_lea.sflag [#allocation12], %s200
        %s202 = sand.u32 %s86, 1
        %s203 = smul.addr %s202, 16
        %s204 = scalar_lea.vmem [#allocation11], %s203
        // Predicated region
        $region41: #{tpu_custom_call.1} parent=31 // pred_check
          %p205 = pneg %p99
        $region42: #{tpu_custom_call.1} parent=31 // pred_check_branch
          %207 = sbr.rel (%p205) target = $region44
        $region43: #{tpu_custom_call.1} parent=31 // pred_region
          %208 = dma.done %s201, 256
        $region44: #{tpu_custom_call.1} parent=31 // pred_fallthru
          _
        %209 = sfence
        %p210 = pneg %p50
        %p211 = pneg %p47
        %p212 = pneg %p71
        %p213 = pneg %p68
        %s214 = sand.u32 %s86, 1
        %s215 = scalar_lea.sflag [#allocation12], %s214
        %s216 = sand.u32 %s86, 1
        %s217 = smul.addr %s216, 16
        %s218 = scalar_lea.vmem [#allocation11], %s217
        %p219 = pneg %p99
        %p220 = pneg %p96
        %p221 = pneg %p125
        %p222 = pneg %p122
        %s223 = sand.u32 %s112, 1
        %s224 = scalar_lea.sflag [#allocation8], %s223
        %s225 = sand.u32 %s112, 1
        %s226 = smul.addr %s225, 2
        %s227 = scalar_lea.vmem [#allocation13], %s226
        %v228 = vld [vmem:[%s204] sm:$0xff]
        %v229 = vld [vmem:[%s204 + $0x8] sm:$0xff]
        %vm230 = vcmask 64512
        %v232 = vsel %vm230, 1.0, 0
        %234 = vmatprep.subr.mxu0 %v229
        %235 = vmatpush1.msra.mxu0 %v228
        %236 = vmatprep.subr.mxu0 0.0
        %237 = vmatpush1.msra.mxu0 0.0
        %238 = vmatprep.subr.mxu0 0.0
        %239 = vmatpush1.msra.mxu0 0.0
        %240 = vmatprep.subr.mxu0 0.0
        %241 = vmatpush1.msra.mxu0 0.0
        %242 = vmatprep.subr.mxu0 0.0
        %243 = vmatpush1.msra.mxu0 0.0
        %244 = vmatprep.subr.mxu0 0.0
        %245 = vmatpush1.msra.mxu0 0.0
        %246 = vmatprep.subr.mxu0 0.0
        %247 = vmatpush1.msra.mxu0 0.0
        %248 = vmatprep.subr.mxu0 0.0
        %249 = vmatpush1.msra.mxu0 0.0
        %250 = vmatprep.subr.mxu0 0.0
        %251 = vmatpush1.msra.mxu0 0.0
        %252 = vmatprep.subr.mxu0 0.0
        %253 = vmatpush1.msra.mxu0 0.0
        %254 = vmatprep.subr.mxu0 0.0
        %255 = vmatpush1.msra.mxu0 0.0
        %256 = vmatprep.subr.mxu0 0.0
        %257 = vmatpush1.msra.mxu0 0.0
        %258 = vmatprep.subr.mxu0 0.0
        %259 = vmatpush1.msra.mxu0 0.0
        %260 = vmatprep.subr.mxu0 0.0
        %261 = vmatpush1.msra.mxu0 0.0
        %262 = vmatprep.subr.mxu0 0.0
        %263 = vmatpush1.msra.mxu0 0.0
        %264 = vmatprep.subr.mxu0 0.0
        %265 = vmatpush1.msra.mxu0 0.0
        %266 = vmatprep.subr.mxu0 0.0
        %267 = vmatpush1.msra.mxu0 0.0
        %268 = vmatprep.subr.mxu0 0.0
        %269 = vmatpush1.msra.mxu0 0.0
        %270 = vmatprep.subr.mxu0 0.0
        %271 = vmatpush1.msra.mxu0 0.0
        %272 = vmatprep.subr.mxu0 0.0
        %273 = vmatpush1.msra.mxu0 0.0
        %274 = vmatprep.subr.mxu0 0.0
        %275 = vmatpush1.msra.mxu0 0.0
        %276 = vmatprep.subr.mxu0 0.0
        %277 = vmatpush1.msra.mxu0 0.0
        %278 = vmatprep.subr.mxu0 0.0
        %279 = vmatpush1.msra.mxu0 0.0
        %280 = vmatprep.subr.mxu0 0.0
        %281 = vmatpush1.msra.mxu0 0.0
        %282 = vmatprep.subr.mxu0 0.0
        %283 = vmatpush1.msra.mxu0 0.0
        %284 = vmatprep.subr.mxu0 0.0
        %285 = vmatpush1.msra.mxu0 0.0
        %286 = vmatprep.subr.mxu0 0.0
        %287 = vmatpush1.msra.mxu0 0.0
        %288 = vmatprep.subr.mxu0 0.0
        %289 = vmatpush1.msra.mxu0 0.0
        %290 = vmatprep.subr.mxu0 0.0
        %291 = vmatpush1.msra.mxu0 0.0
        %292 = vmatprep.subr.mxu0 0.0
        %293 = vmatpush1.msra.mxu0 0.0
        %294 = vmatprep.subr.mxu0 0.0
        %295 = vmatpush1.msra.mxu0 0.0
        %296 = vmatprep.subr.mxu0 0.0
        %297 = vmatpush1.msra.mxu0 0.0
        %298 = vmatprep.mubr.f32.mxu0 0.0
        %299 = vmatmul.mubr.f32.gmra.mrb[0].mxu0 %v232
        %v300 = vpop.f32.mrb[0].mxu0
        %v301 = vadd.f32 0.0, %v300
        %v302 = vpop.f32.mrb[0].mxu0
        %v303 = vadd.f32 0.0, %v302
        %304 = vdwg.mxu0
        %v305 = vrot.slane %v228, 4
        %v306 = vmax.f32 %v228, %v305
        %v307 = vrot.slane %v306, 2
        %v308 = vmax.f32 %v306, %v307
        %v309 = vrot.slane %v308, 1
        %v310 = vmax.f32 %v308, %v309
        %v311 = vrot.slane %v229, 4
        %v312 = vmax.f32 %v229, %v311
        %v313 = vrot.slane %v312, 2
        %v314 = vmax.f32 %v312, %v313
        %v315 = vrot.slane %v314, 1
        %v316 = vmax.f32 %v314, %v315
        %p317 = scmp.eq.s32.totalorder %s27, 0
        // Predicated region
        $region45: #{tpu_custom_call.1} parent=31 // pred_check
          %p318 = pneg %p317
        $region46: #{tpu_custom_call.1} parent=31 // pred_check_branch
          %320 = sbr.rel (%p318) target = $region48
        $region47: #{tpu_custom_call.1} parent=31 // pred_region
          %v321 = vlaneseq
          %vm322 = vcmp.ge.s32.totalorder %v321, 0
          %vm323 = vcmp.lt.s32.totalorder %v321, 256
          %vm324 = vmand %vm322, %vm323
          %325 = vst.msk [vmem:[#allocation2] sm:$0x3] %vm324, 0.0
          %326 = vst.msk [vmem:[#allocation3] sm:$0x3] %vm324, -inf
        $region48: #{tpu_custom_call.1} parent=31 // pred_fallthru
          _
        %v327 = vld [vmem:[#allocation2] sm:$0x3]
        %v330 = vcombine.low %v301, %v303
        %v332 = vunpack.c.l.s4 1966171168
        %v333 = vunpack.c.0.s8 %v332
        %v334 = vlaneseq
        %v335 = vshrl.u32 %v334, 7
        %v336 = vsub.s32 %v333, %v335
        %v337 = vrot.slane %v330, %v336
        %v339 = vunpack.c.l.s4 1966171168
        %v340 = vunpack.c.0.s8 %v339
        %v341 = vlaneseq
        %v342 = vshrl.u32 %v341, 7
        %v343 = vsub.s32 %v340, %v342
        %v344 = vrot.slane %v337, %v343
        %v346 = vadd.f32 %v327, %v344
        %v347 = vlaneseq
        %vm348 = vcmp.ge.s32.totalorder %v347, 0
        %vm349 = vcmp.lt.s32.totalorder %v347, 256
        %vm350 = vmand %vm348, %vm349
        %351 = vst.msk [vmem:[#allocation2] sm:$0x3] %vm350, %v346
        %v352 = vld [vmem:[#allocation3] sm:$0x3]
        %v355 = vcombine.low %v310, %v316
        %v357 = vunpack.c.l.s4 1966171168
        %v358 = vunpack.c.0.s8 %v357
        %v359 = vlaneseq
        %v360 = vshrl.u32 %v359, 7
        %v361 = vsub.s32 %v358, %v360
        %v362 = vrot.slane %v355, %v361
        %v364 = vunpack.c.l.s4 1966171168
        %v365 = vunpack.c.0.s8 %v364
        %v366 = vlaneseq
        %v367 = vshrl.u32 %v366, 7
        %v368 = vsub.s32 %v365, %v367
        %v369 = vrot.slane %v362, %v368
        %v371 = vmax.f32 %v352, %v369
        %372 = vst.msk [vmem:[#allocation3] sm:$0x3] %vm350, %v371
        %p373 = scmp.eq.s32.totalorder %s27, 1
        // Predicated region
        $region49: #{tpu_custom_call.1} parent=31 // pred_check
          %p374 = pneg %p373
        $region50: #{tpu_custom_call.1} parent=31 // pred_check_branch
          %376 = sbr.rel (%p374) target = $region52
        $region51: #{tpu_custom_call.1} parent=31 // pred_region
          %v377 = vld [vmem:[#allocation2] sm:$0x3]
          %v378 = vmul.f32 %v377, 0.0625
          %v379 = vld [vmem:[#allocation3] sm:$0x3]
          %vm380 = vcmask 386048
          %381 = vst.msk [vmem:[#allocation4] sm:$0x3] %vm380, 0.0
          %vm382 = vcmask 779648
          %383 = vst.msk [vmem:[#allocation4 + $0x4] sm:$0x3] %vm382, 0.0
          %vm384 = vcmp.lt.s32.totalorder %v347, 3
          %vm385 = vmand %vm348, %vm384
          %386 = vst.msk [vmem:[#allocation5] sm:$0x1] %vm385, 0.0
          %vm387 = vcmp.ge.s32.totalorder %v347, 3
          %vm388 = vcmp.lt.s32.totalorder %v347, 6
          %vm389 = vmand %vm387, %vm388
          %390 = vst.msk [vmem:[#allocation5 + $0x2] sm:$0x1] %vm389, 0.0
          %392 = vrot.lane.b32.xlu0 %v378, 48
          %v393 = vpop.permute.xlu0 %392
          %v394 = vrot.slane %v393, 7
          %vm395 = vcmask 392192
          %v396 = vsel %vm395, %v394, %v393
          %vm398 = vcmp.ge.s32.totalorder %v347, 48
          %vm399 = vcmp.lt.s32.totalorder %v347, 304
          %vm400 = vmand %vm398, %vm399
          %401 = vst.msk [vmem:[#allocation4] ss:$2 sm:$0x7] %vm400, %v396
          %403 = vrot.lane.b32.xlu0 %v379, 48
          %v404 = vpop.permute.xlu0 %403
          %v405 = vrot.slane %v404, 7
          %v406 = vsel %vm395, %v405, %v404
          %s408 = scalar_lea.vmem [#allocation4], 1
          %409 = vst.msk [vmem:[%s408] ss:$2 sm:$0x7] %vm400, %v406
          %v410 = vld [vmem:[#allocation4] ss:$2 sm:$0x3]
          %v411 = vld [vmem:[#allocation4] ss:$2 sm:$0x7]
          %v412 = vld [vmem:[%s408] ss:$2 sm:$0x3]
          %v413 = vld [vmem:[%s408] ss:$2 sm:$0x7]
          %s414 = sld [smem:[#allocation6]]
          %v415 = vstv %s414
          %v416 = vmul.f32 %v415, %v410
          %v417 = vadd.f32 %v416, 0.0
          %s418 = sld [smem:[#allocation6 + $0x7]]
          %v419 = vstv %s418
          %v420 = vmul.f32 %v419, %v411
          %422 = vrot.lane.b32.xlu0 %v420, 112
          %v423 = vpop.permute.xlu0 %422
          %v424 = vrot.slane %v423, 1
          %vm425 = vcmask 916480
          %v426 = vsel %vm425, %v423, %v424
          %v428 = vadd.f32 %v417, %v426
          %s429 = sld [smem:[#allocation6 + $0xe]]
          %v430 = vstv %s429
          %v431 = vmul.f32 %v430, %v411
          %433 = vrot.lane.b32.xlu0 %v431, 96
          %v434 = vpop.permute.xlu0 %433
          %v435 = vrot.slane %v434, 1
          %vm436 = vcmask 785408
          %v437 = vsel %vm436, %v434, %v435
          %v439 = vadd.f32 %v428, %v437
          %s440 = sld [smem:[#allocation6 + $0x15]]
          %v441 = vstv %s440
          %v442 = vmul.f32 %v441, %v411
          %444 = vrot.lane.b32.xlu0 %v442, 80
          %v445 = vpop.permute.xlu0 %444
          %v446 = vrot.slane %v445, 1
          %vm447 = vcmask 654336
          %v448 = vsel %vm447, %v445, %v446
          %v450 = vadd.f32 %v439, %v448
          %s451 = sld [smem:[#allocation6 + $0x1c]]
          %v452 = vstv %s451
          %v453 = vmul.f32 %v452, %v411
          %455 = vrot.lane.b32.xlu0 %v453, 64
          %v456 = vpop.permute.xlu0 %455
          %v457 = vrot.slane %v456, 1
          %vm458 = vcmask 523264
          %v459 = vsel %vm458, %v456, %v457
          %v461 = vadd.f32 %v450, %v459
          %s462 = sld [smem:[#allocation6 + $0x23]]
          %v463 = vstv %s462
          %v464 = vmul.f32 %v463, %v411
          %466 = vrot.lane.b32.xlu0 %v464, 48
          %v467 = vpop.permute.xlu0 %466
          %v468 = vrot.slane %v467, 1
          %v469 = vsel %vm395, %v467, %v468
          %v471 = vadd.f32 %v461, %v469
          %s472 = sld [smem:[#allocation6 + $0x2a]]
          %v473 = vstv %s472
          %v474 = vmul.f32 %v473, %v411
          %476 = vrot.lane.b32.xlu0 %v474, 32
          %v477 = vpop.permute.xlu0 %476
          %v478 = vrot.slane %v477, 1
          %vm479 = vcmask 261120
          %v480 = vsel %vm479, %v477, %v478
          %v482 = vadd.f32 %v471, %v480
          %s483 = sld [smem:[#allocation6 + $0x31]]
          %v484 = vstv %s483
          %v485 = vmul.f32 %v484, %v412
          %v486 = vadd.f32 %v482, %v485
          %s487 = sld [smem:[#allocation6 + $0x38]]
          %v488 = vstv %s487
          %v489 = vmul.f32 %v488, %v413
          %491 = vrot.lane.b32.xlu0 %v489, 112
          %v492 = vpop.permute.xlu0 %491
          %v493 = vrot.slane %v492, 1
          %v494 = vsel %vm425, %v492, %v493
          %v496 = vadd.f32 %v486, %v494
          %s497 = sld [smem:[#allocation6 + $0x3f]]
          %v498 = vstv %s497
          %v499 = vmul.f32 %v498, %v413
          %501 = vrot.lane.b32.xlu0 %v499, 96
          %v502 = vpop.permute.xlu0 %501
          %v503 = vrot.slane %v502, 1
          %v504 = vsel %vm436, %v502, %v503
          %v506 = vadd.f32 %v496, %v504
          %s507 = sld [smem:[#allocation6 + $0x46]]
          %v508 = vstv %s507
          %v509 = vmul.f32 %v508, %v413
          %511 = vrot.lane.b32.xlu0 %v509, 80
          %v512 = vpop.permute.xlu0 %511
          %v513 = vrot.slane %v512, 1
          %v514 = vsel %vm447, %v512, %v513
          %v516 = vadd.f32 %v506, %v514
          %s517 = sld [smem:[#allocation6 + $0x4d]]
          %v518 = vstv %s517
          %v519 = vmul.f32 %v518, %v413
          %521 = vrot.lane.b32.xlu0 %v519, 64
          %v522 = vpop.permute.xlu0 %521
          %v523 = vrot.slane %v522, 1
          %v524 = vsel %vm458, %v522, %v523
          %v526 = vadd.f32 %v516, %v524
          %s527 = sld [smem:[#allocation6 + $0x54]]
          %v528 = vstv %s527
          %v529 = vmul.f32 %v528, %v413
          %531 = vrot.lane.b32.xlu0 %v529, 48
          %v532 = vpop.permute.xlu0 %531
          %v533 = vrot.slane %v532, 1
          %v534 = vsel %vm395, %v532, %v533
          %v536 = vadd.f32 %v526, %v534
          %s537 = sld [smem:[#allocation6 + $0x5b]]
          %v538 = vstv %s537
          %v539 = vmul.f32 %v538, %v413
          %541 = vrot.lane.b32.xlu0 %v539, 32
          %v542 = vpop.permute.xlu0 %541
          %v543 = vrot.slane %v542, 1
          %v544 = vsel %vm479, %v542, %v543
          %v546 = vadd.f32 %v536, %v544
          %548 = vrot.lane.b32.xlu0 %v546, 3
          %v549 = vpop.permute.xlu0 %548
          %v550 = vrot.slane %v549, 7
          %vm551 = vcmask 23552
          %v552 = vsel %vm551, %v550, %v549
          %vm554 = vcmp.lt.s32.totalorder %v347, 259
          %vm555 = vmand %vm387, %vm554
          %556 = vst.msk [vmem:[#allocation5] sm:$0x7] %vm555, %v552
          %v557 = vld [vmem:[#allocation5] sm:$0x3]
          %v558 = vld [vmem:[#allocation10] ss:$8 sm:$0x3]
          %v559 = vmul.f32 %v557, %v558
          %v560 = vadd.f32 %v559, 0.0
          %s561 = sld [smem:[#allocation6 + $0x1]]
          %v562 = vstv %s561
          %v563 = vmul.f32 %v562, %v410
          %v564 = vadd.f32 %v563, 0.0
          %s565 = sld [smem:[#allocation6 + $0x8]]
          %v566 = vstv %s565
          %v567 = vmul.f32 %v566, %v411
          %569 = vrot.lane.b32.xlu0 %v567, 112
          %v570 = vpop.permute.xlu0 %569
          %v571 = vrot.slane %v570, 1
          %v572 = vsel %vm425, %v570, %v571
          %v574 = vadd.f32 %v564, %v572
          %s575 = sld [smem:[#allocation6 + $0xf]]
          %v576 = vstv %s575
          %v577 = vmul.f32 %v576, %v411
          %579 = vrot.lane.b32.xlu0 %v577, 96
          %v580 = vpop.permute.xlu0 %579
          %v581 = vrot.slane %v580, 1
          %v582 = vsel %vm436, %v580, %v581
          %v584 = vadd.f32 %v574, %v582
          %s585 = sld [smem:[#allocation6 + $0x16]]
          %v586 = vstv %s585
          %v587 = vmul.f32 %v586, %v411
          %589 = vrot.lane.b32.xlu0 %v587, 80
          %v590 = vpop.permute.xlu0 %589
          %v591 = vrot.slane %v590, 1
          %v592 = vsel %vm447, %v590, %v591
          %v594 = vadd.f32 %v584, %v592
          %s595 = sld [smem:[#allocation6 + $0x1d]]
          %v596 = vstv %s595
          %v597 = vmul.f32 %v596, %v411
          %599 = vrot.lane.b32.xlu0 %v597, 64
          %v600 = vpop.permute.xlu0 %599
          %v601 = vrot.slane %v600, 1
          %v602 = vsel %vm458, %v600, %v601
          %v604 = vadd.f32 %v594, %v602
          %s605 = sld [smem:[#allocation6 + $0x24]]
          %v606 = vstv %s605
          %v607 = vmul.f32 %v606, %v411
          %609 = vrot.lane.b32.xlu0 %v607, 48
          %v610 = vpop.permute.xlu0 %609
          %v611 = vrot.slane %v610, 1
          %v612 = vsel %vm395, %v610, %v611
          %v614 = vadd.f32 %v604, %v612
          %s615 = sld [smem:[#allocation6 + $0x2b]]
          %v616 = vstv %s615
          %v617 = vmul.f32 %v616, %v411
          %619 = vrot.lane.b32.xlu0 %v617, 32
          %v620 = vpop.permute.xlu0 %619
          %v621 = vrot.slane %v620, 1
          %v622 = vsel %vm479, %v620, %v621
          %v624 = vadd.f32 %v614, %v622
          %s625 = sld [smem:[#allocation6 + $0x32]]
          %v626 = vstv %s625
          %v627 = vmul.f32 %v626, %v412
          %v628 = vadd.f32 %v624, %v627
          %s629 = sld [smem:[#allocation6 + $0x39]]
          %v630 = vstv %s629
          %v631 = vmul.f32 %v630, %v413
          %633 = vrot.lane.b32.xlu0 %v631, 112
          %v634 = vpop.permute.xlu0 %633
          %v635 = vrot.slane %v634, 1
          %v636 = vsel %vm425, %v634, %v635
          %v638 = vadd.f32 %v628, %v636
          %s639 = sld [smem:[#allocation6 + $0x40]]
          %v640 = vstv %s639
          %v641 = vmul.f32 %v640, %v413
          %643 = vrot.lane.b32.xlu0 %v641, 96
          %v644 = vpop.permute.xlu0 %643
          %v645 = vrot.slane %v644, 1
          %v646 = vsel %vm436, %v644, %v645
          %v648 = vadd.f32 %v638, %v646
          %s649 = sld [smem:[#allocation6 + $0x47]]
          %v650 = vstv %s649
          %v651 = vmul.f32 %v650, %v413
          %653 = vrot.lane.b32.xlu0 %v651, 80
          %v654 = vpop.permute.xlu0 %653
          %v655 = vrot.slane %v654, 1
          %v656 = vsel %vm447, %v654, %v655
          %v658 = vadd.f32 %v648, %v656
          %s659 = sld [smem:[#allocation6 + $0x4e]]
          %v660 = vstv %s659
          %v661 = vmul.f32 %v660, %v413
          %663 = vrot.lane.b32.xlu0 %v661, 64
          %v664 = vpop.permute.xlu0 %663
          %v665 = vrot.slane %v664, 1
          %v666 = vsel %vm458, %v664, %v665
          %v668 = vadd.f32 %v658, %v666
          %s669 = sld [smem:[#allocation6 + $0x55]]
          %v670 = vstv %s669
          %v671 = vmul.f32 %v670, %v413
          %673 = vrot.lane.b32.xlu0 %v671, 48
          %v674 = vpop.permute.xlu0 %673
          %v675 = vrot.slane %v674, 1
          %v676 = vsel %vm395, %v674, %v675
          %v678 = vadd.f32 %v668, %v676
          %s679 = sld [smem:[#allocation6 + $0x5c]]
          %v680 = vstv %s679
          %v681 = vmul.f32 %v680, %v413
          %683 = vrot.lane.b32.xlu0 %v681, 32
          %v684 = vpop.permute.xlu0 %683
          %v685 = vrot.slane %v684, 1
          %v686 = vsel %vm479, %v684, %v685
          %v688 = vadd.f32 %v678, %v686
          %690 = vrot.lane.b32.xlu0 %v688, 3
          %v691 = vpop.permute.xlu0 %690
          %v692 = vrot.slane %v691, 7
          %v693 = vsel %vm551, %v692, %v691
          %695 = vst.msk [vmem:[#allocation5] sm:$0x7] %vm555, %v693
          %v696 = vld [vmem:[#allocation5] sm:$0x7]
          %s697 = scalar_lea.vmem [#allocation10], 1
          %v698 = vld [vmem:[%s697] ss:$8 sm:$0x3]
          %700 = vrot.lane.b32.xlu0 %v698, 1
          %v701 = vpop.permute.xlu0 %700
          %v702 = vrot.slane %v701, 7
          %vm703 = vcmask 7168
          %v704 = vsel %vm703, %v702, %v701
          %v706 = vmul.f32 %v696, %v704
          %708 = vrot.lane.b32.xlu0 %v706, 127
          %v709 = vpop.permute.xlu0 %708
          %v710 = vrot.slane %v709, 1
          %vm711 = vcmask 1039360
          %v712 = vsel %vm711, %v709, %v710
          %v714 = vadd.f32 %v560, %v712
          %s715 = sld [smem:[#allocation6 + $0x2]]
          %v716 = vstv %s715
          %v717 = vmul.f32 %v716, %v410
          %v718 = vadd.f32 %v717, 0.0
          %s719 = sld [smem:[#allocation6 + $0x9]]
          %v720 = vstv %s719
          %v721 = vmul.f32 %v720, %v411
          %723 = vrot.lane.b32.xlu0 %v721, 112
          %v724 = vpop.permute.xlu0 %723
          %v725 = vrot.slane %v724, 1
          %v726 = vsel %vm425, %v724, %v725
          %v728 = vadd.f32 %v718, %v726
          %s729 = sld [smem:[#allocation6 + $0x10]]
          %v730 = vstv %s729
          %v731 = vmul.f32 %v730, %v411
          %733 = vrot.lane.b32.xlu0 %v731, 96
          %v734 = vpop.permute.xlu0 %733
          %v735 = vrot.slane %v734, 1
          %v736 = vsel %vm436, %v734, %v735
          %v738 = vadd.f32 %v728, %v736
          %s739 = sld [smem:[#allocation6 + $0x17]]
          %v740 = vstv %s739
          %v741 = vmul.f32 %v740, %v411
          %743 = vrot.lane.b32.xlu0 %v741, 80
          %v744 = vpop.permute.xlu0 %743
          %v745 = vrot.slane %v744, 1
          %v746 = vsel %vm447, %v744, %v745
          %v748 = vadd.f32 %v738, %v746
          %s749 = sld [smem:[#allocation6 + $0x1e]]
          %v750 = vstv %s749
          %v751 = vmul.f32 %v750, %v411
          %753 = vrot.lane.b32.xlu0 %v751, 64
          %v754 = vpop.permute.xlu0 %753
          %v755 = vrot.slane %v754, 1
          %v756 = vsel %vm458, %v754, %v755
          %v758 = vadd.f32 %v748, %v756
          %s759 = sld [smem:[#allocation6 + $0x25]]
          %v760 = vstv %s759
          %v761 = vmul.f32 %v760, %v411
          %763 = vrot.lane.b32.xlu0 %v761, 48
          %v764 = vpop.permute.xlu0 %763
          %v765 = vrot.slane %v764, 1
          %v766 = vsel %vm395, %v764, %v765
          %v768 = vadd.f32 %v758, %v766
          %s769 = sld [smem:[#allocation6 + $0x2c]]
          %v770 = vstv %s769
          %v771 = vmul.f32 %v770, %v411
          %773 = vrot.lane.b32.xlu0 %v771, 32
          %v774 = vpop.permute.xlu0 %773
          %v775 = vrot.slane %v774, 1
          %v776 = vsel %vm479, %v774, %v775
          %v778 = vadd.f32 %v768, %v776
          %s779 = sld [smem:[#allocation6 + $0x33]]
          %v780 = vstv %s779
          %v781 = vmul.f32 %v780, %v412
          %v782 = vadd.f32 %v778, %v781
          %s783 = sld [smem:[#allocation6 + $0x3a]]
          %v784 = vstv %s783
          %v785 = vmul.f32 %v784, %v413
          %787 = vrot.lane.b32.xlu0 %v785, 112
          %v788 = vpop.permute.xlu0 %787
          %v789 = vrot.slane %v788, 1
          %v790 = vsel %vm425, %v788, %v789
          %v792 = vadd.f32 %v782, %v790
          %s793 = sld [smem:[#allocation6 + $0x41]]
          %v794 = vstv %s793
          %v795 = vmul.f32 %v794, %v413
          %797 = vrot.lane.b32.xlu0 %v795, 96
          %v798 = vpop.permute.xlu0 %797
          %v799 = vrot.slane %v798, 1
          %v800 = vsel %vm436, %v798, %v799
          %v802 = vadd.f32 %v792, %v800
          %s803 = sld [smem:[#allocation6 + $0x48]]
          %v804 = vstv %s803
          %v805 = vmul.f32 %v804, %v413
          %807 = vrot.lane.b32.xlu0 %v805, 80
          %v808 = vpop.permute.xlu0 %807
          %v809 = vrot.slane %v808, 1
          %v810 = vsel %vm447, %v808, %v809
          %v812 = vadd.f32 %v802, %v810
          %s813 = sld [smem:[#allocation6 + $0x4f]]
          %v814 = vstv %s813
          %v815 = vmul.f32 %v814, %v413
          %817 = vrot.lane.b32.xlu0 %v815, 64
          %v818 = vpop.permute.xlu0 %817
          %v819 = vrot.slane %v818, 1
          %v820 = vsel %vm458, %v818, %v819
          %v822 = vadd.f32 %v812, %v820
          %s823 = sld [smem:[#allocation6 + $0x56]]
          %v824 = vstv %s823
          %v825 = vmul.f32 %v824, %v413
          %827 = vrot.lane.b32.xlu0 %v825, 48
          %v828 = vpop.permute.xlu0 %827
          %v829 = vrot.slane %v828, 1
          %v830 = vsel %vm395, %v828, %v829
          %v832 = vadd.f32 %v822, %v830
          %s833 = sld [smem:[#allocation6 + $0x5d]]
          %v834 = vstv %s833
          %v835 = vmul.f32 %v834, %v413
          %837 = vrot.lane.b32.xlu0 %v835, 32
          %v838 = vpop.permute.xlu0 %837
          %v839 = vrot.slane %v838, 1
          %v840 = vsel %vm479, %v838, %v839
          %v842 = vadd.f32 %v832, %v840
          %844 = vrot.lane.b32.xlu0 %v842, 3
          %v845 = vpop.permute.xlu0 %844
          %v846 = vrot.slane %v845, 7
          %v847 = vsel %vm551, %v846, %v845
          %849 = vst.msk [vmem:[#allocation5] sm:$0x7] %vm555, %v847
          %v850 = vld [vmem:[#allocation5] sm:$0x7]
          %s851 = scalar_lea.vmem [#allocation10], 2
          %v852 = vld [vmem:[%s851] ss:$8 sm:$0x3]
          %854 = vrot.lane.b32.xlu0 %v852, 2
          %v855 = vpop.permute.xlu0 %854
          %v856 = vrot.slane %v855, 7
          %vm857 = vcmask 15360
          %v858 = vsel %vm857, %v856, %v855
          %v860 = vmul.f32 %v850, %v858
          %862 = vrot.lane.b32.xlu0 %v860, 126
          %v863 = vpop.permute.xlu0 %862
          %v864 = vrot.slane %v863, 1
          %vm865 = vcmask 1031168
          %v866 = vsel %vm865, %v863, %v864
          %v868 = vadd.f32 %v714, %v866
          %s869 = sld [smem:[#allocation6 + $0x3]]
          %v870 = vstv %s869
          %v871 = vmul.f32 %v870, %v410
          %v872 = vadd.f32 %v871, 0.0
          %s873 = sld [smem:[#allocation6 + $0xa]]
          %v874 = vstv %s873
          %v875 = vmul.f32 %v874, %v411
          %877 = vrot.lane.b32.xlu0 %v875, 112
          %v878 = vpop.permute.xlu0 %877
          %v879 = vrot.slane %v878, 1
          %v880 = vsel %vm425, %v878, %v879
          %v882 = vadd.f32 %v872, %v880
          %s883 = sld [smem:[#allocation6 + $0x11]]
          %v884 = vstv %s883
          %v885 = vmul.f32 %v884, %v411
          %887 = vrot.lane.b32.xlu0 %v885, 96
          %v888 = vpop.permute.xlu0 %887
          %v889 = vrot.slane %v888, 1
          %v890 = vsel %vm436, %v888, %v889
          %v892 = vadd.f32 %v882, %v890
          %s893 = sld [smem:[#allocation6 + $0x18]]
          %v894 = vstv %s893
          %v895 = vmul.f32 %v894, %v411
          %897 = vrot.lane.b32.xlu0 %v895, 80
          %v898 = vpop.permute.xlu0 %897
          %v899 = vrot.slane %v898, 1
          %v900 = vsel %vm447, %v898, %v899
          %v902 = vadd.f32 %v892, %v900
          %s903 = sld [smem:[#allocation6 + $0x1f]]
          %v904 = vstv %s903
          %v905 = vmul.f32 %v904, %v411
          %907 = vrot.lane.b32.xlu0 %v905, 64
          %v908 = vpop.permute.xlu0 %907
          %v909 = vrot.slane %v908, 1
          %v910 = vsel %vm458, %v908, %v909
          %v912 = vadd.f32 %v902, %v910
          %s913 = sld [smem:[#allocation6 + $0x26]]
          %v914 = vstv %s913
          %v915 = vmul.f32 %v914, %v411
          %917 = vrot.lane.b32.xlu0 %v915, 48
          %v918 = vpop.permute.xlu0 %917
          %v919 = vrot.slane %v918, 1
          %v920 = vsel %vm395, %v918, %v919
          %v922 = vadd.f32 %v912, %v920
          %s923 = sld [smem:[#allocation6 + $0x2d]]
          %v924 = vstv %s923
          %v925 = vmul.f32 %v924, %v411
          %927 = vrot.lane.b32.xlu0 %v925, 32
          %v928 = vpop.permute.xlu0 %927
          %v929 = vrot.slane %v928, 1
          %v930 = vsel %vm479, %v928, %v929
          %v932 = vadd.f32 %v922, %v930
          %s933 = sld [smem:[#allocation6 + $0x34]]
          %v934 = vstv %s933
          %v935 = vmul.f32 %v934, %v412
          %v936 = vadd.f32 %v932, %v935
          %s937 = sld [smem:[#allocation6 + $0x3b]]
          %v938 = vstv %s937
          %v939 = vmul.f32 %v938, %v413
          %941 = vrot.lane.b32.xlu0 %v939, 112
          %v942 = vpop.permute.xlu0 %941
          %v943 = vrot.slane %v942, 1
          %v944 = vsel %vm425, %v942, %v943
          %v946 = vadd.f32 %v936, %v944
          %s947 = sld [smem:[#allocation6 + $0x42]]
          %v948 = vstv %s947
          %v949 = vmul.f32 %v948, %v413
          %951 = vrot.lane.b32.xlu0 %v949, 96
          %v952 = vpop.permute.xlu0 %951
          %v953 = vrot.slane %v952, 1
          %v954 = vsel %vm436, %v952, %v953
          %v956 = vadd.f32 %v946, %v954
          %s957 = sld [smem:[#allocation6 + $0x49]]
          %v958 = vstv %s957
          %v959 = vmul.f32 %v958, %v413
          %961 = vrot.lane.b32.xlu0 %v959, 80
          %v962 = vpop.permute.xlu0 %961
          %v963 = vrot.slane %v962, 1
          %v964 = vsel %vm447, %v962, %v963
          %v966 = vadd.f32 %v956, %v964
          %s967 = sld [smem:[#allocation6 + $0x50]]
          %v968 = vstv %s967
          %v969 = vmul.f32 %v968, %v413
          %971 = vrot.lane.b32.xlu0 %v969, 64
          %v972 = vpop.permute.xlu0 %971
          %v973 = vrot.slane %v972, 1
          %v974 = vsel %vm458, %v972, %v973
          %v976 = vadd.f32 %v966, %v974
          %s977 = sld [smem:[#allocation6 + $0x57]]
          %v978 = vstv %s977
          %v979 = vmul.f32 %v978, %v413
          %981 = vrot.lane.b32.xlu0 %v979, 48
          %v982 = vpop.permute.xlu0 %981
          %v983 = vrot.slane %v982, 1
          %v984 = vsel %vm395, %v982, %v983
          %v986 = vadd.f32 %v976, %v984
          %s987 = sld [smem:[#allocation6 + $0x5e]]
          %v988 = vstv %s987
          %v989 = vmul.f32 %v988, %v413
          %991 = vrot.lane.b32.xlu0 %v989, 32
          %v992 = vpop.permute.xlu0 %991
          %v993 = vrot.slane %v992, 1
          %v994 = vsel %vm479, %v992, %v993
          %v996 = vadd.f32 %v986, %v994
          %998 = vrot.lane.b32.xlu0 %v996, 3
          %v999 = vpop.permute.xlu0 %998
          %v1000 = vrot.slane %v999, 7
          %v1001 = vsel %vm551, %v1000, %v999
          %1003 = vst.msk [vmem:[#allocation5] sm:$0x7] %vm555, %v1001
          %v1004 = vld [vmem:[#allocation5] sm:$0x7]
          %s1005 = scalar_lea.vmem [#allocation10], 3
          %v1006 = vld [vmem:[%s1005] ss:$8 sm:$0x3]
          %1008 = vrot.lane.b32.xlu0 %v1006, 3
          %v1009 = vpop.permute.xlu0 %1008
          %v1010 = vrot.slane %v1009, 7
          %v1011 = vsel %vm551, %v1010, %v1009
          %v1013 = vmul.f32 %v1004, %v1011
          %1015 = vrot.lane.b32.xlu0 %v1013, 125
          %v1016 = vpop.permute.xlu0 %1015
          %v1017 = vrot.slane %v1016, 1
          %vm1018 = vcmask 1022976
          %v1019 = vsel %vm1018, %v1016, %v1017
          %v1021 = vadd.f32 %v868, %v1019
          %s1022 = sld [smem:[#allocation6 + $0x4]]
          %v1023 = vstv %s1022
          %v1024 = vmul.f32 %v1023, %v410
          %v1025 = vadd.f32 %v1024, 0.0
          %s1026 = sld [smem:[#allocation6 + $0xb]]
          %v1027 = vstv %s1026
          %v1028 = vmul.f32 %v1027, %v411
          %1030 = vrot.lane.b32.xlu0 %v1028, 112
          %v1031 = vpop.permute.xlu0 %1030
          %v1032 = vrot.slane %v1031, 1
          %v1033 = vsel %vm425, %v1031, %v1032
          %v1035 = vadd.f32 %v1025, %v1033
          %s1036 = sld [smem:[#allocation6 + $0x12]]
          %v1037 = vstv %s1036
          %v1038 = vmul.f32 %v1037, %v411
          %1040 = vrot.lane.b32.xlu0 %v1038, 96
          %v1041 = vpop.permute.xlu0 %1040
          %v1042 = vrot.slane %v1041, 1
          %v1043 = vsel %vm436, %v1041, %v1042
          %v1045 = vadd.f32 %v1035, %v1043
          %s1046 = sld [smem:[#allocation6 + $0x19]]
          %v1047 = vstv %s1046
          %v1048 = vmul.f32 %v1047, %v411
          %1050 = vrot.lane.b32.xlu0 %v1048, 80
          %v1051 = vpop.permute.xlu0 %1050
          %v1052 = vrot.slane %v1051, 1
          %v1053 = vsel %vm447, %v1051, %v1052
          %v1055 = vadd.f32 %v1045, %v1053
          %s1056 = sld [smem:[#allocation6 + $0x20]]
          %v1057 = vstv %s1056
          %v1058 = vmul.f32 %v1057, %v411
          %1060 = vrot.lane.b32.xlu0 %v1058, 64
          %v1061 = vpop.permute.xlu0 %1060
          %v1062 = vrot.slane %v1061, 1
          %v1063 = vsel %vm458, %v1061, %v1062
          %v1065 = vadd.f32 %v1055, %v1063
          %s1066 = sld [smem:[#allocation6 + $0x27]]
          %v1067 = vstv %s1066
          %v1068 = vmul.f32 %v1067, %v411
          %1070 = vrot.lane.b32.xlu0 %v1068, 48
          %v1071 = vpop.permute.xlu0 %1070
          %v1072 = vrot.slane %v1071, 1
          %v1073 = vsel %vm395, %v1071, %v1072
          %v1075 = vadd.f32 %v1065, %v1073
          %s1076 = sld [smem:[#allocation6 + $0x2e]]
          %v1077 = vstv %s1076
          %v1078 = vmul.f32 %v1077, %v411
          %1080 = vrot.lane.b32.xlu0 %v1078, 32
          %v1081 = vpop.permute.xlu0 %1080
          %v1082 = vrot.slane %v1081, 1
          %v1083 = vsel %vm479, %v1081, %v1082
          %v1085 = vadd.f32 %v1075, %v1083
          %s1086 = sld [smem:[#allocation6 + $0x35]]
          %v1087 = vstv %s1086
          %v1088 = vmul.f32 %v1087, %v412
          %v1089 = vadd.f32 %v1085, %v1088
          %s1090 = sld [smem:[#allocation6 + $0x3c]]
          %v1091 = vstv %s1090
          %v1092 = vmul.f32 %v1091, %v413
          %1094 = vrot.lane.b32.xlu0 %v1092, 112
          %v1095 = vpop.permute.xlu0 %1094
          %v1096 = vrot.slane %v1095, 1
          %v1097 = vsel %vm425, %v1095, %v1096
          %v1099 = vadd.f32 %v1089, %v1097
          %s1100 = sld [smem:[#allocation6 + $0x43]]
          %v1101 = vstv %s1100
          %v1102 = vmul.f32 %v1101, %v413
          %1104 = vrot.lane.b32.xlu0 %v1102, 96
          %v1105 = vpop.permute.xlu0 %1104
          %v1106 = vrot.slane %v1105, 1
          %v1107 = vsel %vm436, %v1105, %v1106
          %v1109 = vadd.f32 %v1099, %v1107
          %s1110 = sld [smem:[#allocation6 + $0x4a]]
          %v1111 = vstv %s1110
          %v1112 = vmul.f32 %v1111, %v413
          %1114 = vrot.lane.b32.xlu0 %v1112, 80
          %v1115 = vpop.permute.xlu0 %1114
          %v1116 = vrot.slane %v1115, 1
          %v1117 = vsel %vm447, %v1115, %v1116
          %v1119 = vadd.f32 %v1109, %v1117
          %s1120 = sld [smem:[#allocation6 + $0x51]]
          %v1121 = vstv %s1120
          %v1122 = vmul.f32 %v1121, %v413
          %1124 = vrot.lane.b32.xlu0 %v1122, 64
          %v1125 = vpop.permute.xlu0 %1124
          %v1126 = vrot.slane %v1125, 1
          %v1127 = vsel %vm458, %v1125, %v1126
          %v1129 = vadd.f32 %v1119, %v1127
          %s1130 = sld [smem:[#allocation6 + $0x58]]
          %v1131 = vstv %s1130
          %v1132 = vmul.f32 %v1131, %v413
          %1134 = vrot.lane.b32.xlu0 %v1132, 48
          %v1135 = vpop.permute.xlu0 %1134
          %v1136 = vrot.slane %v1135, 1
          %v1137 = vsel %vm395, %v1135, %v1136
          %v1139 = vadd.f32 %v1129, %v1137
          %s1140 = sld [smem:[#allocation6 + $0x5f]]
          %v1141 = vstv %s1140
          %v1142 = vmul.f32 %v1141, %v413
          %1144 = vrot.lane.b32.xlu0 %v1142, 32
          %v1145 = vpop.permute.xlu0 %1144
          %v1146 = vrot.slane %v1145, 1
          %v1147 = vsel %vm479, %v1145, %v1146
          %v1149 = vadd.f32 %v1139, %v1147
          %1151 = vrot.lane.b32.xlu0 %v1149, 3
          %v1152 = vpop.permute.xlu0 %1151
          %v1153 = vrot.slane %v1152, 7
          %v1154 = vsel %vm551, %v1153, %v1152
          %1156 = vst.msk [vmem:[#allocation5] sm:$0x7] %vm555, %v1154
          %v1157 = vld [vmem:[#allocation5] sm:$0x7]
          %s1158 = scalar_lea.vmem [#allocation10], 4
          %v1159 = vld [vmem:[%s1158] ss:$8 sm:$0x3]
          %1161 = vrot.lane.b32.xlu0 %v1159, 4
          %v1162 = vpop.permute.xlu0 %1161
          %v1163 = vrot.slane %v1162, 7
          %vm1164 = vcmask 31744
          %v1165 = vsel %vm1164, %v1163, %v1162
          %v1167 = vmul.f32 %v1157, %v1165
          %1169 = vrot.lane.b32.xlu0 %v1167, 124
          %v1170 = vpop.permute.xlu0 %1169
          %v1171 = vrot.slane %v1170, 1
          %vm1172 = vcmask 1014784
          %v1173 = vsel %vm1172, %v1170, %v1171
          %v1175 = vadd.f32 %v1021, %v1173
          %s1176 = sld [smem:[#allocation6 + $0x5]]
          %v1177 = vstv %s1176
          %v1178 = vmul.f32 %v1177, %v410
          %v1179 = vadd.f32 %v1178, 0.0
          %s1180 = sld [smem:[#allocation6 + $0xc]]
          %v1181 = vstv %s1180
          %v1182 = vmul.f32 %v1181, %v411
          %1184 = vrot.lane.b32.xlu0 %v1182, 112
          %v1185 = vpop.permute.xlu0 %1184
          %v1186 = vrot.slane %v1185, 1
          %v1187 = vsel %vm425, %v1185, %v1186
          %v1189 = vadd.f32 %v1179, %v1187
          %s1190 = sld [smem:[#allocation6 + $0x13]]
          %v1191 = vstv %s1190
          %v1192 = vmul.f32 %v1191, %v411
          %1194 = vrot.lane.b32.xlu0 %v1192, 96
          %v1195 = vpop.permute.xlu0 %1194
          %v1196 = vrot.slane %v1195, 1
          %v1197 = vsel %vm436, %v1195, %v1196
          %v1199 = vadd.f32 %v1189, %v1197
          %s1200 = sld [smem:[#allocation6 + $0x1a]]
          %v1201 = vstv %s1200
          %v1202 = vmul.f32 %v1201, %v411
          %1204 = vrot.lane.b32.xlu0 %v1202, 80
          %v1205 = vpop.permute.xlu0 %1204
          %v1206 = vrot.slane %v1205, 1
          %v1207 = vsel %vm447, %v1205, %v1206
          %v1209 = vadd.f32 %v1199, %v1207
          %s1210 = sld [smem:[#allocation6 + $0x21]]
          %v1211 = vstv %s1210
          %v1212 = vmul.f32 %v1211, %v411
          %1214 = vrot.lane.b32.xlu0 %v1212, 64
          %v1215 = vpop.permute.xlu0 %1214
          %v1216 = vrot.slane %v1215, 1
          %v1217 = vsel %vm458, %v1215, %v1216
          %v1219 = vadd.f32 %v1209, %v1217
          %s1220 = sld [smem:[#allocation6 + $0x28]]
          %v1221 = vstv %s1220
          %v1222 = vmul.f32 %v1221, %v411
          %1224 = vrot.lane.b32.xlu0 %v1222, 48
          %v1225 = vpop.permute.xlu0 %1224
          %v1226 = vrot.slane %v1225, 1
          %v1227 = vsel %vm395, %v1225, %v1226
          %v1229 = vadd.f32 %v1219, %v1227
          %s1230 = sld [smem:[#allocation6 + $0x2f]]
          %v1231 = vstv %s1230
          %v1232 = vmul.f32 %v1231, %v411
          %1234 = vrot.lane.b32.xlu0 %v1232, 32
          %v1235 = vpop.permute.xlu0 %1234
          %v1236 = vrot.slane %v1235, 1
          %v1237 = vsel %vm479, %v1235, %v1236
          %v1239 = vadd.f32 %v1229, %v1237
          %s1240 = sld [smem:[#allocation6 + $0x36]]
          %v1241 = vstv %s1240
          %v1242 = vmul.f32 %v1241, %v412
          %v1243 = vadd.f32 %v1239, %v1242
          %s1244 = sld [smem:[#allocation6 + $0x3d]]
          %v1245 = vstv %s1244
          %v1246 = vmul.f32 %v1245, %v413
          %1248 = vrot.lane.b32.xlu0 %v1246, 112
          %v1249 = vpop.permute.xlu0 %1248
          %v1250 = vrot.slane %v1249, 1
          %v1251 = vsel %vm425, %v1249, %v1250
          %v1253 = vadd.f32 %v1243, %v1251
          %s1254 = sld [smem:[#allocation6 + $0x44]]
          %v1255 = vstv %s1254
          %v1256 = vmul.f32 %v1255, %v413
          %1258 = vrot.lane.b32.xlu0 %v1256, 96
          %v1259 = vpop.permute.xlu0 %1258
          %v1260 = vrot.slane %v1259, 1
          %v1261 = vsel %vm436, %v1259, %v1260
          %v1263 = vadd.f32 %v1253, %v1261
          %s1264 = sld [smem:[#allocation6 + $0x4b]]
          %v1265 = vstv %s1264
          %v1266 = vmul.f32 %v1265, %v413
          %1268 = vrot.lane.b32.xlu0 %v1266, 80
          %v1269 = vpop.permute.xlu0 %1268
          %v1270 = vrot.slane %v1269, 1
          %v1271 = vsel %vm447, %v1269, %v1270
          %v1273 = vadd.f32 %v1263, %v1271
          %s1274 = sld [smem:[#allocation6 + $0x52]]
          %v1275 = vstv %s1274
          %v1276 = vmul.f32 %v1275, %v413
          %1278 = vrot.lane.b32.xlu0 %v1276, 64
          %v1279 = vpop.permute.xlu0 %1278
          %v1280 = vrot.slane %v1279, 1
          %v1281 = vsel %vm458, %v1279, %v1280
          %v1283 = vadd.f32 %v1273, %v1281
          %s1284 = sld [smem:[#allocation6 + $0x59]]
          %v1285 = vstv %s1284
          %v1286 = vmul.f32 %v1285, %v413
          %1288 = vrot.lane.b32.xlu0 %v1286, 48
          %v1289 = vpop.permute.xlu0 %1288
          %v1290 = vrot.slane %v1289, 1
          %v1291 = vsel %vm395, %v1289, %v1290
          %v1293 = vadd.f32 %v1283, %v1291
          %s1294 = sld [smem:[#allocation6 + $0x60]]
          %v1295 = vstv %s1294
          %v1296 = vmul.f32 %v1295, %v413
          %1298 = vrot.lane.b32.xlu0 %v1296, 32
          %v1299 = vpop.permute.xlu0 %1298
          %v1300 = vrot.slane %v1299, 1
          %v1301 = vsel %vm479, %v1299, %v1300
          %v1303 = vadd.f32 %v1293, %v1301
          %1305 = vrot.lane.b32.xlu0 %v1303, 3
          %v1306 = vpop.permute.xlu0 %1305
          %v1307 = vrot.slane %v1306, 7
          %v1308 = vsel %vm551, %v1307, %v1306
          %1310 = vst.msk [vmem:[#allocation5] sm:$0x7] %vm555, %v1308
          %v1311 = vld [vmem:[#allocation5] sm:$0x7]
          %s1312 = scalar_lea.vmem [#allocation10], 5
          %v1313 = vld [vmem:[%s1312] ss:$8 sm:$0x3]
          %1315 = vrot.lane.b32.xlu0 %v1313, 5
          %v1316 = vpop.permute.xlu0 %1315
          %v1317 = vrot.slane %v1316, 7
          %vm1318 = vcmask 39936
          %v1319 = vsel %vm1318, %v1317, %v1316
          %v1321 = vmul.f32 %v1311, %v1319
          %1323 = vrot.lane.b32.xlu0 %v1321, 123
          %v1324 = vpop.permute.xlu0 %1323
          %v1325 = vrot.slane %v1324, 1
          %vm1326 = vcmask 1006592
          %v1327 = vsel %vm1326, %v1324, %v1325
          %v1329 = vadd.f32 %v1175, %v1327
          %s1330 = sld [smem:[#allocation6 + $0x6]]
          %v1331 = vstv %s1330
          %v1332 = vmul.f32 %v1331, %v410
          %v1333 = vadd.f32 %v1332, 0.0
          %s1334 = sld [smem:[#allocation6 + $0xd]]
          %v1335 = vstv %s1334
          %v1336 = vmul.f32 %v1335, %v411
          %1338 = vrot.lane.b32.xlu0 %v1336, 112
          %v1339 = vpop.permute.xlu0 %1338
          %v1340 = vrot.slane %v1339, 1
          %v1341 = vsel %vm425, %v1339, %v1340
          %v1343 = vadd.f32 %v1333, %v1341
          %s1344 = sld [smem:[#allocation6 + $0x14]]
          %v1345 = vstv %s1344
          %v1346 = vmul.f32 %v1345, %v411
          %1348 = vrot.lane.b32.xlu0 %v1346, 96
          %v1349 = vpop.permute.xlu0 %1348
          %v1350 = vrot.slane %v1349, 1
          %v1351 = vsel %vm436, %v1349, %v1350
          %v1353 = vadd.f32 %v1343, %v1351
          %s1354 = sld [smem:[#allocation6 + $0x1b]]
          %v1355 = vstv %s1354
          %v1356 = vmul.f32 %v1355, %v411
          %1358 = vrot.lane.b32.xlu0 %v1356, 80
          %v1359 = vpop.permute.xlu0 %1358
          %v1360 = vrot.slane %v1359, 1
          %v1361 = vsel %vm447, %v1359, %v1360
          %v1363 = vadd.f32 %v1353, %v1361
          %s1364 = sld [smem:[#allocation6 + $0x22]]
          %v1365 = vstv %s1364
          %v1366 = vmul.f32 %v1365, %v411
          %1368 = vrot.lane.b32.xlu0 %v1366, 64
          %v1369 = vpop.permute.xlu0 %1368
          %v1370 = vrot.slane %v1369, 1
          %v1371 = vsel %vm458, %v1369, %v1370
          %v1373 = vadd.f32 %v1363, %v1371
          %s1374 = sld [smem:[#allocation6 + $0x29]]
          %v1375 = vstv %s1374
          %v1376 = vmul.f32 %v1375, %v411
          %1378 = vrot.lane.b32.xlu0 %v1376, 48
          %v1379 = vpop.permute.xlu0 %1378
          %v1380 = vrot.slane %v1379, 1
          %v1381 = vsel %vm395, %v1379, %v1380
          %v1383 = vadd.f32 %v1373, %v1381
          %s1384 = sld [smem:[#allocation6 + $0x30]]
          %v1385 = vstv %s1384
          %v1386 = vmul.f32 %v1385, %v411
          %1388 = vrot.lane.b32.xlu0 %v1386, 32
          %v1389 = vpop.permute.xlu0 %1388
          %v1390 = vrot.slane %v1389, 1
          %v1391 = vsel %vm479, %v1389, %v1390
          %v1393 = vadd.f32 %v1383, %v1391
          %s1394 = sld [smem:[#allocation6 + $0x37]]
          %v1395 = vstv %s1394
          %v1396 = vmul.f32 %v1395, %v412
          %v1397 = vadd.f32 %v1393, %v1396
          %s1398 = sld [smem:[#allocation6 + $0x3e]]
          %v1399 = vstv %s1398
          %v1400 = vmul.f32 %v1399, %v413
          %1402 = vrot.lane.b32.xlu0 %v1400, 112
          %v1403 = vpop.permute.xlu0 %1402
          %v1404 = vrot.slane %v1403, 1
          %v1405 = vsel %vm425, %v1403, %v1404
          %v1407 = vadd.f32 %v1397, %v1405
          %s1408 = sld [smem:[#allocation6 + $0x45]]
          %v1409 = vstv %s1408
          %v1410 = vmul.f32 %v1409, %v413
          %1412 = vrot.lane.b32.xlu0 %v1410, 96
          %v1413 = vpop.permute.xlu0 %1412
          %v1414 = vrot.slane %v1413, 1
          %v1415 = vsel %vm436, %v1413, %v1414
          %v1417 = vadd.f32 %v1407, %v1415
          %s1418 = sld [smem:[#allocation6 + $0x4c]]
          %v1419 = vstv %s1418
          %v1420 = vmul.f32 %v1419, %v413
          %1422 = vrot.lane.b32.xlu0 %v1420, 80
          %v1423 = vpop.permute.xlu0 %1422
          %v1424 = vrot.slane %v1423, 1
          %v1425 = vsel %vm447, %v1423, %v1424
          %v1427 = vadd.f32 %v1417, %v1425
          %s1428 = sld [smem:[#allocation6 + $0x53]]
          %v1429 = vstv %s1428
          %v1430 = vmul.f32 %v1429, %v413
          %1432 = vrot.lane.b32.xlu0 %v1430, 64
          %v1433 = vpop.permute.xlu0 %1432
          %v1434 = vrot.slane %v1433, 1
          %v1435 = vsel %vm458, %v1433, %v1434
          %v1437 = vadd.f32 %v1427, %v1435
          %s1438 = sld [smem:[#allocation6 + $0x5a]]
          %v1439 = vstv %s1438
          %v1440 = vmul.f32 %v1439, %v413
          %1442 = vrot.lane.b32.xlu0 %v1440, 48
          %v1443 = vpop.permute.xlu0 %1442
          %v1444 = vrot.slane %v1443, 1
          %v1445 = vsel %vm395, %v1443, %v1444
          %v1447 = vadd.f32 %v1437, %v1445
          %s1448 = sld [smem:[#allocation6 + $0x61]]
          %v1449 = vstv %s1448
          %v1450 = vmul.f32 %v1449, %v413
          %1452 = vrot.lane.b32.xlu0 %v1450, 32
          %v1453 = vpop.permute.xlu0 %1452
          %v1454 = vrot.slane %v1453, 1
          %v1455 = vsel %vm479, %v1453, %v1454
          %v1457 = vadd.f32 %v1447, %v1455
          %1459 = vrot.lane.b32.xlu0 %v1457, 3
          %v1460 = vpop.permute.xlu0 %1459
          %v1461 = vrot.slane %v1460, 7
          %v1462 = vsel %vm551, %v1461, %v1460
          %1464 = vst.msk [vmem:[#allocation5] sm:$0x7] %vm555, %v1462
          %v1465 = vld [vmem:[#allocation5] sm:$0x7]
          %s1466 = scalar_lea.vmem [#allocation10], 6
          %v1467 = vld [vmem:[%s1466] ss:$8 sm:$0x3]
          %1469 = vrot.lane.b32.xlu0 %v1467, 6
          %v1470 = vpop.permute.xlu0 %1469
          %v1471 = vrot.slane %v1470, 7
          %vm1472 = vcmask 48128
          %v1473 = vsel %vm1472, %v1471, %v1470
          %v1475 = vmul.f32 %v1465, %v1473
          %1477 = vrot.lane.b32.xlu0 %v1475, 122
          %v1478 = vpop.permute.xlu0 %1477
          %v1479 = vrot.slane %v1478, 1
          %vm1480 = vcmask 998400
          %v1481 = vsel %vm1480, %v1478, %v1479
          %v1483 = vadd.f32 %v1329, %v1481
          %v1484 = vxor.u32 %v1483, 2147483648
          %v1485 = vmul.f32 %v1484, 1.442695
          %v1486 = vpow.pop %v1485
          %v1487 = vadd.f32 %v1486, 1.0
          %v1488 = vrcp.pop %v1487
          %v1489 = vmul.f32 1.0, %v1488
          %1490 = vst.msk [vmem:[%s227] sm:$0x3] %vm350, %v1489
        $region52: #{tpu_custom_call.1} parent=31 // pred_fallthru
          _
        %s1491 = sand.u32 %s112, 1
        %s1492 = scalar_lea.sflag [#allocation8], %s1491
        %s1493 = sand.u32 %s112, 1
        %s1494 = smul.addr %s1493, 2
        %s1495 = scalar_lea.vmem [#allocation13], %s1494
        // Predicated region
        $region53: #{tpu_custom_call.1} parent=31 // pred_check
          %p1496 = pneg %p122
        $region54: #{tpu_custom_call.1} parent=31 // pred_check_branch
          %1498 = sbr.rel (%p1496) target = $region56
        $region55: #{tpu_custom_call.1} parent=31 // pred_region
          %s1500 = ssub.s32 32, 32
          %1501 = vsyncadd %s1492, %s1500
          %s1502 = smul.addr %s26, 2
          %s1503 = smul.addr %s1502, 16
          %s1504 = scalar_lea.hbm %s3, %s1503
          %s1506 = sshll.u32 %s1495, 4
          %s1507 = int_to_ptr.vmem [resolvable:$true] %s1506
          %1509 = dma.vmem_to_hbm [thread:$0]  %s1507, 32, %s1504, %s1492
        $region56: #{tpu_custom_call.1} parent=31 // pred_fallthru
          _
      $region32: #{tpu_custom_call.1} parent=5 // pred_fallthru
        _
      %p1510 = scmp.le.s32.totalorder 2, %s17
      // Predicated region
      $region57: #{tpu_custom_call.1} parent=5 // pred_check
        %p1511 = pneg %p1510
      $region58: #{tpu_custom_call.1} parent=5 // pred_check_branch
        %1513 = sbr.rel (%p1511) target = $region60
      $region59: #{tpu_custom_call.1} parent=5 // pred_region
        %s1514 = ssub.s32 %s17, 2
        // Predicated region
        $region61: #{tpu_custom_call.1} parent=59 // pred_check
          %p1515 = pneg %p128
        $region62: #{tpu_custom_call.1} parent=59 // pred_check_branch
          %1517 = sbr.rel (%p1515) target = $region64
        $region63: #{tpu_custom_call.1} parent=59 // pred_region
          %s1518 = sand.u32 %s113, 1
          %s1519 = scalar_lea.sflag [#allocation8], %s1518
          %s1520 = sand.u32 %s113, 1
          %s1521 = smul.addr %s1520, 2
          %s1522 = scalar_lea.vmem [#allocation13], %s1521
          %1523 = dma.done %s1519, 32
        $region64: #{tpu_custom_call.1} parent=59 // pred_fallthru
          _
      $region60: #{tpu_custom_call.1} parent=5 // pred_fallthru
        _
    $region6: #{tpu_custom_call.1} parent=1 // loop_footer
      %s21 = sadd.s32 1, %s17
    $region7: #{tpu_custom_call.1} parent=1 // loop_footer_branch
      %16 = sbr.rel target = $region3
    $region8: #{tpu_custom_call.1} parent=1 // loop_exit
      _
    %1524 = vsyncpa [#allocation7], 1
    %s1525 = scalar_lea.sflag [#allocation7], 1
    %1526 = vsyncpa %s1525, 1
    %1527 = vsyncpa [#allocation12], 1
    %s1528 = scalar_lea.sflag [#allocation12], 1
    %1529 = vsyncpa %s1528, 1
    %1530 = vsyncpa [#allocation8], 1
    %s1531 = scalar_lea.sflag [#allocation8], 1
    %1532 = vsyncpa %s1531, 1
    %1533 = vsyncpa [#allocation9], 1
    %s1534 = scalar_lea.sflag [#allocation9], 1
    %1535 = vsyncpa %s1534, 1

</llo_original>
